<compile_context>
chip_gen: v6e
topology: v6e:2x2x1
jax: 0.10.0
libtpu: 0.0.40
codegen_flags: <defaults>
</compile_context>

<pallas_src>
import functools

import jax
import jax.numpy as jnp
from jax.experimental import pallas as pl
from jax.experimental.pallas import tpu as pltpu


def _pick_tile(n, cap):
    """Largest power-of-two divisor of n that is <= cap (falls back to n)."""
    for t in (2048, 1024, 512, 256, 128, 64, 32, 16, 8):
        if t <= cap and n % t == 0:
            return t
    return n


# ---------------------------------------------------------------------------
# Stage 1: RMSNorm + fused q/k/v projection (1x1 conv == per-token matmul)
# ---------------------------------------------------------------------------
def _qkv_proj_kernel(x_ref, w_ref, q_ref, k_ref, v_ref, *, hidden):
    x = x_ref[0]                                     # (TN, C) f32
    # F.normalize(x, dim=channels); (gamma+1)*sqrt(C) and the q-scale are
    # folded into the weight rows/columns in the wrapper.
    ssq = jnp.sum(x * x, axis=-1, keepdims=True)
    inv = jax.lax.rsqrt(jnp.maximum(ssq, 1e-24))     # == 1 / max(||x||, 1e-12)
    xn_b = (x * inv).astype(jnp.bfloat16)            # bf16 MXU operand

    # One wide matmul for all of q, k, v and all heads (N = 3*heads*dim_head).
    qkv = jnp.dot(xn_b, w_ref[...], preferred_element_type=jnp.float32)

    # Lane-dense (heads*dim_head)-wide stores, 128-aligned static splits.
    q_ref[0] = qkv[:, :hidden].astype(jnp.bfloat16)
    k_ref[0] = qkv[:, hidden:2 * hidden].astype(jnp.bfloat16)
    v_ref[0] = qkv[:, 2 * hidden:].astype(jnp.bfloat16)


# ---------------------------------------------------------------------------
# Stage 2: attention over a q-token tile against full sequence + memory KV,
#          followed by the fused to_out 1x1 conv.
# ---------------------------------------------------------------------------
def _attn_kernel(q_ref, k_ref, v_ref, mk_ref, mv_ref, wo_ref, o_ref, o_all,
                 *, heads, dim_head):
    d = dim_head
    dn = (((1,), (1,)), ((), ()))                    # contract over dim_head

    # heads is small & static; per-head results go straight to VMEM scratch so
    # live vreg ranges stay bounded across the unrolled loop.
    for h in range(heads):
        lo, hi = h * d, (h + 1) * d
        q_h = q_ref[0, :, lo:hi]                     # (TQ, d)  bf16, pre-scaled
        k_h = k_ref[0, :, lo:hi]                     # (N,  d)  bf16
        v_h = v_ref[0, :, lo:hi]                     # (N,  d)  bf16
        mk_h = mk_ref[h]                             # (num_mem, d) bf16
        mv_h = mv_ref[h]

        # Exact softmax over [memory keys ++ sequence keys] without any concat:
        # shared max and shared denominator across the two logit blocks.
        sim_s = jax.lax.dot_general(q_h, k_h, dn,
                                    preferred_element_type=jnp.float32)
        sim_m = jax.lax.dot_general(q_h, mk_h, dn,
                                    preferred_element_type=jnp.float32)
        m = jnp.maximum(jnp.max(sim_s, axis=-1, keepdims=True),
                        jnp.max(sim_m, axis=-1, keepdims=True))
        p_s = jnp.exp(sim_s - m)                     # f32 (v5e-safe)
        p_m = jnp.exp(sim_m - m)
        l = (jnp.sum(p_s, axis=-1, keepdims=True)
             + jnp.sum(p_m, axis=-1, keepdims=True))

        o_h = (jnp.dot(p_s.astype(jnp.bfloat16), v_h,
                       preferred_element_type=jnp.float32)
               + jnp.dot(p_m.astype(jnp.bfloat16), mv_h,
                         preferred_element_type=jnp.float32))
        o_h = o_h * pl.reciprocal(l, approx=True)    # EUP divide
        o_all[:, lo:hi] = o_h.astype(jnp.bfloat16)

    # to_out 1x1 conv: one wide-K matmul over all heads at once.
    o_ref[0] = jnp.dot(o_all[...], wo_ref[...],
                       preferred_element_type=jnp.float32).astype(o_ref.dtype)


# ---------------------------------------------------------------------------
# Wrapper (layout glue only)
# ---------------------------------------------------------------------------
def attention_pallas(x_nchw, gamma, w_qkv, mem_kv, w_out, *, heads, dim_head):
    B, C, H, W = x_nchw.shape
    N = H * W
    d = dim_head
    hidden = heads * d
    num_mem = mem_kv.shape[2]
    assert hidden % 128 == 0, "lane-dense q/k/v needs heads*dim_head % 128 == 0"

    TN = _pick_tile(N, 1024)   # stage-1 token tile (mem-bound: bigger is better)
    TQ = _pick_tile(N, 256)    # stage-2 q tile (bounds the (TQ, N) logits)

    # tokens-major, channels-last; channels stay unpadded (full-dim blocks).
    x_tok = jnp.transpose(x_nchw, (0, 2, 3, 1)).reshape(B, N, C).astype(jnp.float32)

    # Fold RMSNorm's (gamma+1)*sqrt(C) into the projection weight rows and the
    # attention scale into the q columns; fuse q/k/v into ONE wide weight.
    row_scale = ((gamma.reshape(-1) + 1.0) * (float(C) ** 0.5))[:, None]   # (C,1)
    q_scale = float(d) ** -0.5
    w_fused = jnp.concatenate(
        [w_qkv[:, :hidden] * q_scale, w_qkv[:, hidden:]], axis=1) * row_scale
    w_fused = w_fused.astype(jnp.bfloat16)                                  # (C, 3*hidden)

    mem_k = mem_kv[0].astype(jnp.bfloat16)          # (heads, num_mem, d)
    mem_v = mem_kv[1].astype(jnp.bfloat16)
    wo = w_out.astype(jnp.bfloat16)                 # (hidden, C), rows are (h, d)-ordered

    cparams = pltpu.CompilerParams(
        dimension_semantics=("parallel", "parallel"),
        vmem_limit_bytes=64 * 1024 * 1024)

    # ---- Stage 1: RMSNorm + fused q/k/v projection ------------------------
    q, k, v = pl.pallas_call(
        functools.partial(_qkv_proj_kernel, hidden=hidden),
        out_shape=tuple(jax.ShapeDtypeStruct((B, N, hidden), jnp.bfloat16)
                        for _ in range(3)),
        grid_spec=pltpu.PrefetchScalarGridSpec(
            num_scalar_prefetch=0,
            grid=(B, N // TN),
            in_specs=[
                pl.BlockSpec((1, TN, C), lambda b, t: (b, t, 0)),
                pl.BlockSpec((C, 3 * hidden), lambda b, t: (0, 0)),
            ],
            out_specs=tuple(
                pl.BlockSpec((1, TN, hidden), lambda b, t: (b, t, 0))
                for _ in range(3)),
        ),
        compiler_params=cparams,
    )(x_tok, w_fused)

    # ---- Stage 2: attention (+ memory KV) + output projection -------------
    out_tok = pl.pallas_call(
        functools.partial(_attn_kernel, heads=heads, dim_head=d),
        out_shape=jax.ShapeDtypeStruct((B, N, C), jnp.float32),
        grid_spec=pltpu.PrefetchScalarGridSpec(
            num_scalar_prefetch=0,
            grid=(B, N // TQ),
            in_specs=[
                pl.BlockSpec((1, TQ, hidden), lambda b, t: (b, t, 0)),
                pl.BlockSpec((1, N, hidden), lambda b, t: (b, 0, 0)),
                pl.BlockSpec((1, N, hidden), lambda b, t: (b, 0, 0)),
                pl.BlockSpec((heads, num_mem, d), lambda b, t: (0, 0, 0)),
                pl.BlockSpec((heads, num_mem, d), lambda b, t: (0, 0, 0)),
                pl.BlockSpec((hidden, C), lambda b, t: (0, 0)),
            ],
            out_specs=pl.BlockSpec((1, TQ, C), lambda b, t: (b, t, 0)),
            scratch_shapes=[pltpu.VMEM((TQ, hidden), jnp.bfloat16)],
        ),
        compiler_params=cparams,
    )(q, k, v, mem_k, mem_v, wo)

    out = out_tok.reshape(B, H, W, C)
    return jnp.transpose(out, (0, 3, 1, 2))


# ---------------------------------------------------------------------------
# Pure-JAX reference mirroring the PyTorch forward (NCHW, f32)
# ---------------------------------------------------------------------------
def attention_ref(x, gamma, w_qkv, mem_kv, w_out, *, heads, dim_head):
    b, c, hh, ww = x.shape
    scale = float(dim_head) ** -0.5
    norm = jnp.sqrt(jnp.sum(x * x, axis=1, keepdims=True))
    xn = x / jnp.maximum(norm, 1e-12) * (gamma[None, :, None, None] + 1.0) * (c ** 0.5)
    qkv = jnp.einsum('bcxy,cf->bfxy', xn, w_qkv)
    q, k, v = jnp.split(qkv, 3, axis=1)

    def to_heads(t):  # 'b (h c) x y -> b h (x y) c'
        return t.reshape(b, heads, dim_head, hh * ww).transpose(0, 1, 3, 2)

    q, k, v = map(to_heads, (q, k, v))
    mk = jnp.broadcast_to(mem_kv[0], (b,) + mem_kv[0].shape)
    mv = jnp.broadcast_to(mem_kv[1], (b,) + mem_kv[1].shape)
    k = jnp.concatenate([mk, k], axis=2)
    v = jnp.concatenate([mv, v], axis=2)
    q = q * scale
    sim = jnp.einsum('bhid,bhjd->bhij', q, k)
    attn = jax.nn.softmax(sim, axis=-1)
    out = jnp.einsum('bhij,bhjd->bhid', attn, v)
    out = out.transpose(0, 1, 3, 2).reshape(b, heads * dim_head, hh, ww)
    return jnp.einsum('bfxy,fc->bcxy', out, w_out)


if __name__ == "__main__":
    B, C, H, W = 2, 4, 16, 16
    heads, dim_head, num_mem_kv = 4, 32, 4
    hidden = heads * dim_head

    key = jax.random.PRNGKey(0)
    kx, kmem, kqkv, kout = jax.random.split(key, 4)

    x = jax.random.normal(kx, (B, C, H, W), dtype=jnp.float32)
    gamma = jnp.zeros((C,), dtype=jnp.float32)               # torch.zeros(dim,1,1)
    mem_kv = jax.random.normal(kmem, (2, heads, num_mem_kv, dim_head),
                               dtype=jnp.float32)            # torch.randn
    # 1x1 convs, no bias; stored as (in, out) so tokens @ W applies them
    w_qkv = jax.random.normal(kqkv, (C, 3 * hidden), dtype=jnp.float32) * 0.1
    w_out = jax.random.normal(kout, (hidden, C), dtype=jnp.float32) * 0.1

    out = attention_pallas(x, gamma, w_qkv, mem_kv, w_out,
                           heads=heads, dim_head=dim_head)
    out = jax.block_until_ready(out)

    ref = attention_ref(x, gamma, w_qkv, mem_kv, w_out,
                        heads=heads, dim_head=dim_head)
    assert out.shape == (B, C, H, W)
    max_err = float(jnp.max(jnp.abs(out - ref)))
    # bf16 MXU operands + EUP approx reciprocal => slightly looser tolerance
    assert jnp.allclose(out, ref, rtol=5e-2, atol=5e-2), \
        f"max abs err {max_err}"
    print("KERNEL_OK")
</pallas_src>

<mosaic_0001>
module attributes {stable_mosaic.version = 11 : i64} {
  func.func @_qkv_proj_kernel(%arg0: i32, %arg1: i32, %arg2: memref<1x256x4xf32, #tpu.memory_space<vmem>>, %arg3: memref<4x384xbf16, #tpu.memory_space<vmem>>, %arg4: memref<1x256x128xbf16, #tpu.memory_space<vmem>>, %arg5: memref<1x256x128xbf16, #tpu.memory_space<vmem>>, %arg6: memref<1x256x128xbf16, #tpu.memory_space<vmem>>) attributes {dimension_semantics = [#tpu.dimension_semantics<parallel>, #tpu.dimension_semantics<parallel>], iteration_bounds = array<i64: 2, 1>, scalar_prefetch = 0 : i64, scratch_operands = 0 : i64, tpu.core_type = #tpu.core_type<tc>, window_params = [{transform_indices = @transform_0, window_bounds = array<i64: 1, 256, 4>}, {pipeline_mode = #tpu.pipeline_mode<synchronous>, transform_indices = @transform_1, window_bounds = array<i64: 4, 384>}, {transform_indices = @transform_2, window_bounds = array<i64: 1, 256, 128>}, {transform_indices = @transform_3, window_bounds = array<i64: 1, 256, 128>}, {transform_indices = @transform_4, window_bounds = array<i64: 1, 256, 128>}]} {
    %c0 = arith.constant 0 : index
    %c0_0 = arith.constant 0 : index
    %c0_1 = arith.constant 0 : index
    %0 = vector.load %arg2[%c0, %c0_0, %c0_1] : memref<1x256x4xf32, #tpu.memory_space<vmem>>, vector<1x256x4xf32>
    %1 = vector.shape_cast %0 : vector<1x256x4xf32> to vector<256x4xf32>
    %2 = arith.mulf %1, %1 : vector<256x4xf32>
    %cst = arith.constant dense<0.000000e+00> : vector<256xf32>
    %3 = vector.multi_reduction <add>, %2, %cst [1] : vector<256x4xf32> to vector<256xf32>
    %4 = vector.shape_cast %3 : vector<256xf32> to vector<256x1xf32>
    %cst_2 = arith.constant 1.000000e-24 : f32
    %5 = vector.broadcast %cst_2 : f32 to vector<256x1xf32>
    %6 = arith.maximumf %4, %5 : vector<256x1xf32>
    %7 = math.rsqrt %6 : vector<256x1xf32>
    %8 = vector.broadcast %7 : vector<256x1xf32> to vector<256x4xf32>
    %9 = arith.mulf %1, %8 : vector<256x4xf32>
    %10 = arith.truncf %9 : vector<256x4xf32> to vector<256x4xbf16>
    %c0_3 = arith.constant 0 : index
    %c0_4 = arith.constant 0 : index
    %11 = vector.load %arg3[%c0_3, %c0_4] : memref<4x384xbf16, #tpu.memory_space<vmem>>, vector<4x384xbf16>
    %cst_5 = arith.constant dense<0.000000e+00> : vector<256x384xf32>
    %12 = tpu.matmul %10, %11, %cst_5 {dimension_numbers = #tpu.dot_dimension_numbers<[1], [0], [0], [1], [0, 0, 1, 1], [], []>} : vector<256x4xbf16>, vector<4x384xbf16>, vector<256x384xf32> -> vector<256x384xf32>
    %13 = vector.extract_strided_slice %12 {offsets = [0, 0], sizes = [256, 128], strides = [1, 1]} : vector<256x384xf32> to vector<256x128xf32>
    %14 = arith.truncf %13 : vector<256x128xf32> to vector<256x128xbf16>
    %c0_6 = arith.constant 0 : index
    %c0_7 = arith.constant 0 : index
    %c0_8 = arith.constant 0 : index
    %15 = vector.load %arg4[%c0_6, %c0_7, %c0_8] : memref<1x256x128xbf16, #tpu.memory_space<vmem>>, vector<1x256x128xbf16>
    %16 = vector.shape_cast %15 : vector<1x256x128xbf16> to vector<256x128xbf16>
    %17 = vector.shape_cast %14 : vector<256x128xbf16> to vector<1x256x128xbf16>
    tpu.vector_store %arg4[%c0_6, %c0_7, %c0_8], %17 {strides = array<i32>} : memref<1x256x128xbf16, #tpu.memory_space<vmem>>, vector<1x256x128xbf16>,
    %18 = vector.extract_strided_slice %12 {offsets = [0, 128], sizes = [256, 128], strides = [1, 1]} : vector<256x384xf32> to vector<256x128xf32>
    %19 = arith.truncf %18 : vector<256x128xf32> to vector<256x128xbf16>
    %c0_9 = arith.constant 0 : index
    %c0_10 = arith.constant 0 : index
    %c0_11 = arith.constant 0 : index
    %20 = vector.load %arg5[%c0_9, %c0_10, %c0_11] : memref<1x256x128xbf16, #tpu.memory_space<vmem>>, vector<1x256x128xbf16>
    %21 = vector.shape_cast %20 : vector<1x256x128xbf16> to vector<256x128xbf16>
    %22 = vector.shape_cast %19 : vector<256x128xbf16> to vector<1x256x128xbf16>
    tpu.vector_store %arg5[%c0_9, %c0_10, %c0_11], %22 {strides = array<i32>} : memref<1x256x128xbf16, #tpu.memory_space<vmem>>, vector<1x256x128xbf16>,
    %23 = vector.extract_strided_slice %12 {offsets = [0, 256], sizes = [256, 128], strides = [1, 1]} : vector<256x384xf32> to vector<256x128xf32>
    %24 = arith.truncf %23 : vector<256x128xf32> to vector<256x128xbf16>
    %c0_12 = arith.constant 0 : index
    %c0_13 = arith.constant 0 : index
    %c0_14 = arith.constant 0 : index
    %25 = vector.load %arg6[%c0_12, %c0_13, %c0_14] : memref<1x256x128xbf16, #tpu.memory_space<vmem>>, vector<1x256x128xbf16>
    %26 = vector.shape_cast %25 : vector<1x256x128xbf16> to vector<256x128xbf16>
    %27 = vector.shape_cast %24 : vector<256x128xbf16> to vector<1x256x128xbf16>
    tpu.vector_store %arg6[%c0_12, %c0_13, %c0_14], %27 {strides = array<i32>} : memref<1x256x128xbf16, #tpu.memory_space<vmem>>, vector<1x256x128xbf16>,
    return
  }
  func.func @transform_0(%arg0: i32, %arg1: i32) -> (i32, i32, i32) {
    %c0_i32 = arith.constant 0 : i32
    %c0_i32_0 = arith.constant 0 : i32
    return %arg0, %arg1, %c0_i32 : i32, i32, i32
  }
  func.func @transform_1(%arg0: i32, %arg1: i32) -> (i32, i32) {
    %c0_i32 = arith.constant 0 : i32
    %c0_i32_0 = arith.constant 0 : i32
    %c0_i32_1 = arith.constant 0 : i32
    return %c0_i32, %c0_i32_0 : i32, i32
  }
  func.func @transform_2(%arg0: i32, %arg1: i32) -> (i32, i32, i32) {
    %c0_i32 = arith.constant 0 : i32
    %c0_i32_0 = arith.constant 0 : i32
    return %arg0, %arg1, %c0_i32 : i32, i32, i32
  }
  func.func @transform_3(%arg0: i32, %arg1: i32) -> (i32, i32, i32) {
    %c0_i32 = arith.constant 0 : i32
    %c0_i32_0 = arith.constant 0 : i32
    return %arg0, %arg1, %c0_i32 : i32, i32, i32
  }
  func.func @transform_4(%arg0: i32, %arg1: i32) -> (i32, i32, i32) {
    %c0_i32 = arith.constant 0 : i32
    %c0_i32_0 = arith.constant 0 : i32
    return %arg0, %arg1, %c0_i32 : i32, i32, i32
  }
}

</mosaic_0001>

<llo_original>
// kernel: tpu_custom_call.1
$region0: #{tpu_custom_call.1}
  #allocation0 [shape = 'u32[]', space=smem, size = 0x4, offset = 0x4, fixed_abs, tag = 'smem constant byte address 0x4 - core index']
  #allocation1 [shape = 'u32[144,128]{1,0:T(1,128)}', space=vmem, size = 0x12000, scoped, tag = 'internal scratch']
  %s0 = inlined_call_operand.vmem [shape: f32[2,256,4], index: 0, kind: input, shape index: {}]
  %s1 = inlined_call_operand.vmem [shape: bf16[4,384], index: 1, kind: input, shape index: {}]
  %s2 = inlined_call_operand.hbm [shape: bf16[2,256,128], index: 2, kind: output, shape index: {0}]
  %s3 = inlined_call_operand.hbm [shape: bf16[2,256,128], index: 3, kind: output, shape index: {1}]
  %s4 = inlined_call_operand.hbm [shape: bf16[2,256,128], index: 4, kind: output, shape index: {2}]
  %5 = xla_tuple %s2, %s3, %s4
  %s6 = sld [smem:[#allocation0]]
  $region57: #{tpu_custom_call.1} parent=0
    _
  %s8 = ssub.s32 1, %s6
  %s9 = scalar_select 0, %s8, %s6
  $region1: #{tpu_custom_call.1} parent=0
    #allocation2 [shape = 'u8[131072]{0}', space=vmem, size = 0x20000, scoped, tag = 'output window, operand 0']
    #allocation3 [shape = 's32[2]{0}', space=sflag, size = 0x8, scoped, tag = 'scoped memory for tpu_custom_call.1']
    #allocation4 [shape = 'u8[131072]{0}', space=vmem, size = 0x20000, scoped, tag = 'output window, operand 1']
    #allocation5 [shape = 's32[2]{0}', space=sflag, size = 0x8, scoped, tag = 'scoped memory for tpu_custom_call.1']
    #allocation6 [shape = 'u8[131072]{0}', space=vmem, size = 0x20000, scoped, tag = 'output window, operand 2']
    %10 = vsyncpa [#allocation3], 0
    %s11 = scalar_lea.sflag [#allocation3], 1
    %12 = vsyncpa %s11, 0
    %13 = vsyncpa [#allocation5], 0
    %s14 = scalar_lea.sflag [#allocation5], 1
    %15 = vsyncpa %s14, 0
    loop: start=0, step=1, limit=4
    $region2: #{tpu_custom_call.1} parent=1 // loop_pre_header
      _
    $region3: #{tpu_custom_call.1} parent=1 // loop_header
      %s17 = sphi 0, %s21
      %p18 = scmp.ge.s32.totalorder %s17, 4
      %s24 = sphi 0, %s36
      %s25 = sphi 0, %s32
      %s26 = sphi 0, %s24
      %s27 = sphi 0, %s25
      %s28 = sphi 0, %s26
      %s29 = sphi 0, %s27
      %s41 = sphi 0, %s43
      %s44 = sphi 0, %s41
      %s45 = sphi 0, %s44
      %s61 = sphi 0, %s45
      %s65 = sphi 0, %s65
      %s67 = sphi 0, %s65
      %s68 = sphi 0, %s67
      %s82 = sphi 0, %s68
      %s90 = sphi 0, %s92
      %s93 = sphi 0, %s90
      %s94 = sphi 0, %s93
      %s110 = sphi 0, %s94
      %s118 = sphi 0, %s120
      %s121 = sphi 0, %s118
      %s122 = sphi 0, %s121
      %s138 = sphi 0, %s122
      %s146 = sphi 0, %s148
      %s149 = sphi 0, %s146
      %s150 = sphi 0, %s149
      %s166 = sphi 0, %s150
    $region4: #{tpu_custom_call.1} parent=1 // loop_header_branch
      %20 = sbr.rel (%p18) target = $region8
    $region5: #{tpu_custom_call.1} parent=1 // loop_body
      %s22 = ssub.s32 %s17, 1
      %s23 = ssub.s32 %s17, 2
      %s30 = sadd.s32 1, %s25
      %p31 = scmp.ge.s32.totalorder %s30, 1
      %s32 = scalar_select %p31, 0, %s30
      %s33 = sadd.s32 1, %s24
      %s34 = scalar_select %p31, %s33, %s24
      %p35 = scmp.ge.s32.totalorder %s34, 2
      %s36 = scalar_select %p35, 0, %s34
      %s37 = ssub.s32 %s24, %s36
      %s38 = ssub.s32 %s25, %s32
      %s39 = sor.u32 %s37, %s38
      %p40 = scmp.eq.s32.totalorder %s39, 0
      %s42 = sadd.s32 %s41, 1
      %s43 = scalar_select %p40, %s41, %s42
      %p46 = pneg %p40
      %p47 = scmp.eq.s32.totalorder %s17, 1
      %p48 = por %p46, %p47
      %p49 = scmp.ne.s32.totalorder %s41, %s44
      %p50 = scmp.eq.s32.totalorder %s17, 0
      %p51 = por %p49, %p50
      %p52 = scmp.ne.s32.totalorder %s41, %s44
      %p53 = scmp.eq.s32.totalorder %s22, 1
      %p54 = por %p52, %p53
      %p55 = scmp.ne.s32.totalorder %s44, %s45
      %p56 = scmp.eq.s32.totalorder %s22, 0
      %p57 = por %p55, %p56
      %p58 = scmp.ne.s32.totalorder %s44, %s45
      %p59 = scmp.eq.s32.totalorder %s23, 1
      %p60 = por %p58, %p59
      %p62 = scmp.ne.s32.totalorder %s45, %s61
      %p63 = scmp.eq.s32.totalorder %s23, 0
      %p64 = por %p62, %p63
      %s66 = sadd.s32 %s65, 1
      %p69 = scmp.eq.s32.totalorder %s17, 1
      %p70 = scmp.ne.s32.totalorder %s65, %s67
      %p71 = scmp.eq.s32.totalorder %s17, 0
      %p72 = por %p70, %p71
      %p73 = scmp.ne.s32.totalorder %s65, %s67
      %p74 = scmp.eq.s32.totalorder %s22, 1
      %p75 = por %p73, %p74
      %p76 = scmp.ne.s32.totalorder %s67, %s68
      %p77 = scmp.eq.s32.totalorder %s22, 0
      %p78 = por %p76, %p77
      %p79 = scmp.ne.s32.totalorder %s67, %s68
      %p80 = scmp.eq.s32.totalorder %s23, 1
      %p81 = por %p79, %p80
      %p83 = scmp.ne.s32.totalorder %s68, %s82
      %p84 = scmp.eq.s32.totalorder %s23, 0
      %p85 = por %p83, %p84
      %s86 = ssub.s32 %s24, %s36
      %s87 = ssub.s32 %s25, %s32
      %s88 = sor.u32 %s86, %s87
      %p89 = scmp.eq.s32.totalorder %s88, 0
      %s91 = sadd.s32 %s90, 1
      %s92 = scalar_select %p89, %s90, %s91
      %p95 = pneg %p89
      %p96 = scmp.eq.s32.totalorder %s17, 1
      %p97 = por %p95, %p96
      %p98 = scmp.ne.s32.totalorder %s90, %s93
      %p99 = scmp.eq.s32.totalorder %s17, 0
      %p100 = por %p98, %p99
      %p101 = scmp.ne.s32.totalorder %s90, %s93
      %p102 = scmp.eq.s32.totalorder %s22, 1
      %p103 = por %p101, %p102
      %p104 = scmp.ne.s32.totalorder %s93, %s94
      %p105 = scmp.eq.s32.totalorder %s22, 0
      %p106 = por %p104, %p105
      %p107 = scmp.ne.s32.totalorder %s93, %s94
      %p108 = scmp.eq.s32.totalorder %s23, 1
      %p109 = por %p107, %p108
      %p111 = scmp.ne.s32.totalorder %s94, %s110
      %p112 = scmp.eq.s32.totalorder %s23, 0
      %p113 = por %p111, %p112
      %s114 = ssub.s32 %s24, %s36
      %s115 = ssub.s32 %s25, %s32
      %s116 = sor.u32 %s114, %s115
      %p117 = scmp.eq.s32.totalorder %s116, 0
      %s119 = sadd.s32 %s118, 1
      %s120 = scalar_select %p117, %s118, %s119
      %p123 = pneg %p117
      %p124 = scmp.eq.s32.totalorder %s17, 1
      %p125 = por %p123, %p124
      %p126 = scmp.ne.s32.totalorder %s118, %s121
      %p127 = scmp.eq.s32.totalorder %s17, 0
      %p128 = por %p126, %p127
      %p129 = scmp.ne.s32.totalorder %s118, %s121
      %p130 = scmp.eq.s32.totalorder %s22, 1
      %p131 = por %p129, %p130
      %p132 = scmp.ne.s32.totalorder %s121, %s122
      %p133 = scmp.eq.s32.totalorder %s22, 0
      %p134 = por %p132, %p133
      %p135 = scmp.ne.s32.totalorder %s121, %s122
      %p136 = scmp.eq.s32.totalorder %s23, 1
      %p137 = por %p135, %p136
      %p139 = scmp.ne.s32.totalorder %s122, %s138
      %p140 = scmp.eq.s32.totalorder %s23, 0
      %p141 = por %p139, %p140
      %s142 = ssub.s32 %s24, %s36
      %s143 = ssub.s32 %s25, %s32
      %s144 = sor.u32 %s142, %s143
      %p145 = scmp.eq.s32.totalorder %s144, 0
      %s147 = sadd.s32 %s146, 1
      %s148 = scalar_select %p145, %s146, %s147
      %p151 = pneg %p145
      %p152 = scmp.eq.s32.totalorder %s17, 1
      %p153 = por %p151, %p152
      %p154 = scmp.ne.s32.totalorder %s146, %s149
      %p155 = scmp.eq.s32.totalorder %s17, 0
      %p156 = por %p154, %p155
      %p157 = scmp.ne.s32.totalorder %s146, %s149
      %p158 = scmp.eq.s32.totalorder %s22, 1
      %p159 = por %p157, %p158
      %p160 = scmp.ne.s32.totalorder %s149, %s150
      %p161 = scmp.eq.s32.totalorder %s22, 0
      %p162 = por %p160, %p161
      %p163 = scmp.ne.s32.totalorder %s149, %s150
      %p164 = scmp.eq.s32.totalorder %s23, 1
      %p165 = por %p163, %p164
      %p167 = scmp.ne.s32.totalorder %s150, %s166
      %p168 = scmp.eq.s32.totalorder %s23, 0
      %p169 = por %p167, %p168
      %p170 = scmp.le.s32.totalorder 1, %s17
      %p171 = scmp.lt.s32.totalorder %s17, 3
      %p172 = pnand %p170, %p171
      %p173 = pneg %p172
      // Predicated region
      $region9: #{tpu_custom_call.1} parent=5 // pred_check
        _
      $region10: #{tpu_custom_call.1} parent=5 // pred_check_branch
        %175 = sbr.rel (%p172) target = $region12
      $region11: #{tpu_custom_call.1} parent=5 // pred_region
        %s176 = ssub.s32 %s17, 1
        // Predicated region
        $region13: #{tpu_custom_call.1} parent=11 // pred_check
          %p177 = pneg %p78
        $region14: #{tpu_custom_call.1} parent=11 // pred_check_branch
          %179 = sbr.rel (%p177) target = $region16
        $region15: #{tpu_custom_call.1} parent=11 // pred_region
          _
        $region16: #{tpu_custom_call.1} parent=11 // pred_fallthru
          _
      $region12: #{tpu_custom_call.1} parent=5 // pred_fallthru
        _
      %p180 = scmp.lt.s32.totalorder %s17, 2
      // Predicated region
      $region17: #{tpu_custom_call.1} parent=5 // pred_check
        %p181 = pneg %p180
      $region18: #{tpu_custom_call.1} parent=5 // pred_check_branch
        %183 = sbr.rel (%p181) target = $region20
      $region19: #{tpu_custom_call.1} parent=5 // pred_region
        // Predicated region
        $region21: #{tpu_custom_call.1} parent=19 // pred_check
          %p184 = pneg %p51
        $region22: #{tpu_custom_call.1} parent=19 // pred_check_branch
          %186 = sbr.rel (%p184) target = $region24
        $region23: #{tpu_custom_call.1} parent=19 // pred_region
          %s187 = smul.u32 32, %s25
          %p188 = scmp.lt.s32.totalorder %s24, 1
          %s189 = scalar_select %p188, %s24, 1
          %p190 = scmp.lt.s32.totalorder %s187, 31
          %s191 = scalar_select %p190, %s187, 31
          %s192 = smul.addr %s189, 32
          %s193 = sadd.s32 %s191, %s192
          %s194 = smul.addr %s193, 8
          %s195 = scalar_lea.vmem %s0, %s194
          %s196 = smul.u32 32, %s25
        $region24: #{tpu_custom_call.1} parent=19 // pred_fallthru
          _
      $region20: #{tpu_custom_call.1} parent=5 // pred_fallthru
        _
      %p197 = scmp.le.s32.totalorder 1, %s17
      %p198 = scmp.lt.s32.totalorder %s17, 3
      %p199 = pnand %p197, %p198
      %p200 = pneg %p199
      // Predicated region
      $region25: #{tpu_custom_call.1} parent=5 // pred_check
        _
      $region26: #{tpu_custom_call.1} parent=5 // pred_check_branch
        %202 = sbr.rel (%p199) target = $region28
      $region27: #{tpu_custom_call.1} parent=5 // pred_region
        %s203 = ssub.s32 %s17, 1
        %s204 = smul.u32 32, %s27
        %p205 = scmp.lt.s32.totalorder %s26, 1
        %s206 = scalar_select %p205, %s26, 1
        %p207 = scmp.lt.s32.totalorder %s204, 31
        %s208 = scalar_select %p207, %s204, 31
        %s209 = smul.addr %s206, 32
        %s210 = sadd.s32 %s208, %s209
        %s211 = smul.addr %s210, 8
        %s212 = scalar_lea.vmem %s0, %s211
        %p213 = pneg %p57
        %p214 = pneg %p54
        %p215 = pneg %p78
        %p216 = pneg %p75
        %p217 = pneg %p106
        %p218 = pneg %p103
        %s219 = sand.u32 %s93, 1
        %s220 = scalar_lea.sflag [#allocation3], %s219
        %s221 = sand.u32 %s93, 1
        %s222 = smul.addr %s221, 128
        %s223 = scalar_lea.vmem [#allocation2], %s222
        %p224 = pneg %p134
        %p225 = pneg %p131
        %s226 = sand.u32 %s22, 1
        %s227 = scalar_lea.sflag [#allocation5], %s226
        %s228 = sand.u32 %s121, 1
        %s229 = smul.addr %s228, 128
        %s230 = scalar_lea.vmem [#allocation4], %s229
        %p231 = pneg %p162
        %p232 = pneg %p159
        %s233 = sand.u32 %s22, 1
        %s234 = scalar_lea.sflag [#allocation5], %s233
        %s235 = sand.u32 %s149, 1
        %s236 = smul.addr %s235, 128
        %s237 = scalar_lea.vmem [#allocation6], %s236
        %s238 = smul.u32 32, %s27
        %p239 = scmp.lt.s32.totalorder %s26, 1
        %s240 = scalar_select %p239, %s26, 1
        %p241 = scmp.lt.s32.totalorder %s238, 31
        %s242 = scalar_select %p241, %s238, 31
        %s243 = smul.addr %s240, 32
        %s244 = sadd.s32 %s242, %s243
        %s245 = smul.addr %s244, 8
        %s246 = scalar_lea.vmem %s0, %s245
        %s247 = smul.u32 32, %s27
        %s248 = smul.u32 32, %s27
        %s249 = smul.u32 32, %s27
        %s250 = smul.u32 32, %s27
        %v252 = vld [vmem:[%s246] sm:$0xff]
        %v253 = vld [vmem:[%s246 + $0x8] sm:$0xff]
        %v254 = vld [vmem:[%s246 + $0x10] sm:$0xff]
        %v255 = vld [vmem:[%s246 + $0x18] sm:$0xff]
        %v256 = vld [vmem:[%s246 + $0x20] sm:$0xff]
        %v257 = vld [vmem:[%s246 + $0x28] sm:$0xff]
        %v258 = vld [vmem:[%s246 + $0x30] sm:$0xff]
        %v259 = vld [vmem:[%s246 + $0x38] sm:$0xff]
        %v260 = vld [vmem:[%s246 + $0x40] sm:$0xff]
        %v261 = vld [vmem:[%s246 + $0x48] sm:$0xff]
        %v262 = vld [vmem:[%s246 + $0x50] sm:$0xff]
        %v263 = vld [vmem:[%s246 + $0x58] sm:$0xff]
        %v264 = vld [vmem:[%s246 + $0x60] sm:$0xff]
        %v265 = vld [vmem:[%s246 + $0x68] sm:$0xff]
        %v266 = vld [vmem:[%s246 + $0x70] sm:$0xff]
        %v267 = vld [vmem:[%s246 + $0x78] sm:$0xff]
        %v268 = vld [vmem:[%s246 + $0x80] sm:$0xff]
        %v269 = vld [vmem:[%s246 + $0x88] sm:$0xff]
        %v270 = vld [vmem:[%s246 + $0x90] sm:$0xff]
        %v271 = vld [vmem:[%s246 + $0x98] sm:$0xff]
        %v272 = vld [vmem:[%s246 + $0xa0] sm:$0xff]
        %v273 = vld [vmem:[%s246 + $0xa8] sm:$0xff]
        %v274 = vld [vmem:[%s246 + $0xb0] sm:$0xff]
        %v275 = vld [vmem:[%s246 + $0xb8] sm:$0xff]
        %v276 = vld [vmem:[%s246 + $0xc0] sm:$0xff]
        %v277 = vld [vmem:[%s246 + $0xc8] sm:$0xff]
        %v278 = vld [vmem:[%s246 + $0xd0] sm:$0xff]
        %v279 = vld [vmem:[%s246 + $0xd8] sm:$0xff]
        %v280 = vld [vmem:[%s246 + $0xe0] sm:$0xff]
        %v281 = vld [vmem:[%s246 + $0xe8] sm:$0xff]
        %v282 = vld [vmem:[%s246 + $0xf0] sm:$0xff]
        %v283 = vld [vmem:[%s246 + $0xf8] sm:$0xff]
        %v284 = vmul.f32 %v252, %v252
        %v285 = vmul.f32 %v253, %v253
        %v286 = vmul.f32 %v254, %v254
        %v287 = vmul.f32 %v255, %v255
        %v288 = vmul.f32 %v256, %v256
        %v289 = vmul.f32 %v257, %v257
        %v290 = vmul.f32 %v258, %v258
        %v291 = vmul.f32 %v259, %v259
        %v292 = vmul.f32 %v260, %v260
        %v293 = vmul.f32 %v261, %v261
        %v294 = vmul.f32 %v262, %v262
        %v295 = vmul.f32 %v263, %v263
        %v296 = vmul.f32 %v264, %v264
        %v297 = vmul.f32 %v265, %v265
        %v298 = vmul.f32 %v266, %v266
        %v299 = vmul.f32 %v267, %v267
        %v300 = vmul.f32 %v268, %v268
        %v301 = vmul.f32 %v269, %v269
        %v302 = vmul.f32 %v270, %v270
        %v303 = vmul.f32 %v271, %v271
        %v304 = vmul.f32 %v272, %v272
        %v305 = vmul.f32 %v273, %v273
        %v306 = vmul.f32 %v274, %v274
        %v307 = vmul.f32 %v275, %v275
        %v308 = vmul.f32 %v276, %v276
        %v309 = vmul.f32 %v277, %v277
        %v310 = vmul.f32 %v278, %v278
        %v311 = vmul.f32 %v279, %v279
        %v312 = vmul.f32 %v280, %v280
        %v313 = vmul.f32 %v281, %v281
        %v314 = vmul.f32 %v282, %v282
        %v315 = vmul.f32 %v283, %v283
        %vm316 = vcmask 31744
        %v317 = vsel %vm316, %v284, 0.0
        %318 = vadd.xlane.f32.xlu0 %v317
        %v319 = vpop.xlane.xlu0 %318
        %v320 = vsel %vm316, %v285, 0.0
        %321 = vadd.xlane.f32.xlu0 %v320
        %v322 = vpop.xlane.xlu0 %321
        %v323 = vsel %vm316, %v286, 0.0
        %324 = vadd.xlane.f32.xlu0 %v323
        %v325 = vpop.xlane.xlu0 %324
        %v326 = vsel %vm316, %v287, 0.0
        %327 = vadd.xlane.f32.xlu0 %v326
        %v328 = vpop.xlane.xlu0 %327
        %v329 = vsel %vm316, %v288, 0.0
        %330 = vadd.xlane.f32.xlu0 %v329
        %v331 = vpop.xlane.xlu0 %330
        %v332 = vsel %vm316, %v289, 0.0
        %333 = vadd.xlane.f32.xlu0 %v332
        %v334 = vpop.xlane.xlu0 %333
        %v335 = vsel %vm316, %v290, 0.0
        %336 = vadd.xlane.f32.xlu0 %v335
        %v337 = vpop.xlane.xlu0 %336
        %v338 = vsel %vm316, %v291, 0.0
        %339 = vadd.xlane.f32.xlu0 %v338
        %v340 = vpop.xlane.xlu0 %339
        %v341 = vsel %vm316, %v292, 0.0
        %342 = vadd.xlane.f32.xlu0 %v341
        %v343 = vpop.xlane.xlu0 %342
        %v344 = vsel %vm316, %v293, 0.0
        %345 = vadd.xlane.f32.xlu0 %v344
        %v346 = vpop.xlane.xlu0 %345
        %v347 = vsel %vm316, %v294, 0.0
        %348 = vadd.xlane.f32.xlu0 %v347
        %v349 = vpop.xlane.xlu0 %348
        %v350 = vsel %vm316, %v295, 0.0
        %351 = vadd.xlane.f32.xlu0 %v350
        %v352 = vpop.xlane.xlu0 %351
        %v353 = vsel %vm316, %v296, 0.0
        %354 = vadd.xlane.f32.xlu0 %v353
        %v355 = vpop.xlane.xlu0 %354
        %v356 = vsel %vm316, %v297, 0.0
        %357 = vadd.xlane.f32.xlu0 %v356
        %v358 = vpop.xlane.xlu0 %357
        %v359 = vsel %vm316, %v298, 0.0
        %360 = vadd.xlane.f32.xlu0 %v359
        %v361 = vpop.xlane.xlu0 %360
        %v362 = vsel %vm316, %v299, 0.0
        %363 = vadd.xlane.f32.xlu0 %v362
        %v364 = vpop.xlane.xlu0 %363
        %v365 = vsel %vm316, %v300, 0.0
        %366 = vadd.xlane.f32.xlu0 %v365
        %v367 = vpop.xlane.xlu0 %366
        %v368 = vsel %vm316, %v301, 0.0
        %369 = vadd.xlane.f32.xlu0 %v368
        %v370 = vpop.xlane.xlu0 %369
        %v371 = vsel %vm316, %v302, 0.0
        %372 = vadd.xlane.f32.xlu0 %v371
        %v373 = vpop.xlane.xlu0 %372
        %v374 = vsel %vm316, %v303, 0.0
        %375 = vadd.xlane.f32.xlu0 %v374
        %v376 = vpop.xlane.xlu0 %375
        %v377 = vsel %vm316, %v304, 0.0
        %378 = vadd.xlane.f32.xlu0 %v377
        %v379 = vpop.xlane.xlu0 %378
        %v380 = vsel %vm316, %v305, 0.0
        %381 = vadd.xlane.f32.xlu0 %v380
        %v382 = vpop.xlane.xlu0 %381
        %v383 = vsel %vm316, %v306, 0.0
        %384 = vadd.xlane.f32.xlu0 %v383
        %v385 = vpop.xlane.xlu0 %384
        %v386 = vsel %vm316, %v307, 0.0
        %387 = vadd.xlane.f32.xlu0 %v386
        %v388 = vpop.xlane.xlu0 %387
        %v389 = vsel %vm316, %v308, 0.0
        %390 = vadd.xlane.f32.xlu0 %v389
        %v391 = vpop.xlane.xlu0 %390
        %v392 = vsel %vm316, %v309, 0.0
        %393 = vadd.xlane.f32.xlu0 %v392
        %v394 = vpop.xlane.xlu0 %393
        %v395 = vsel %vm316, %v310, 0.0
        %396 = vadd.xlane.f32.xlu0 %v395
        %v397 = vpop.xlane.xlu0 %396
        %v398 = vsel %vm316, %v311, 0.0
        %399 = vadd.xlane.f32.xlu0 %v398
        %v400 = vpop.xlane.xlu0 %399
        %v401 = vsel %vm316, %v312, 0.0
        %402 = vadd.xlane.f32.xlu0 %v401
        %v403 = vpop.xlane.xlu0 %402
        %v404 = vsel %vm316, %v313, 0.0
        %405 = vadd.xlane.f32.xlu0 %v404
        %v406 = vpop.xlane.xlu0 %405
        %v407 = vsel %vm316, %v314, 0.0
        %408 = vadd.xlane.f32.xlu0 %v407
        %v409 = vpop.xlane.xlu0 %408
        %v410 = vsel %vm316, %v315, 0.0
        %411 = vadd.xlane.f32.xlu0 %v410
        %v412 = vpop.xlane.xlu0 %411
        %v413 = vmax.f32 %v319, 1e-24
        %v414 = vmax.f32 %v322, 1e-24
        %v415 = vmax.f32 %v325, 1e-24
        %v416 = vmax.f32 %v328, 1e-24
        %v417 = vmax.f32 %v331, 1e-24
        %v418 = vmax.f32 %v334, 1e-24
        %v419 = vmax.f32 %v337, 1e-24
        %v420 = vmax.f32 %v340, 1e-24
        %v421 = vmax.f32 %v343, 1e-24
        %v422 = vmax.f32 %v346, 1e-24
        %v423 = vmax.f32 %v349, 1e-24
        %v424 = vmax.f32 %v352, 1e-24
        %v425 = vmax.f32 %v355, 1e-24
        %v426 = vmax.f32 %v358, 1e-24
        %v427 = vmax.f32 %v361, 1e-24
        %v428 = vmax.f32 %v364, 1e-24
        %v429 = vmax.f32 %v367, 1e-24
        %v430 = vmax.f32 %v370, 1e-24
        %v431 = vmax.f32 %v373, 1e-24
        %v432 = vmax.f32 %v376, 1e-24
        %v433 = vmax.f32 %v379, 1e-24
        %v434 = vmax.f32 %v382, 1e-24
        %v435 = vmax.f32 %v385, 1e-24
        %v436 = vmax.f32 %v388, 1e-24
        %v437 = vmax.f32 %v391, 1e-24
        %v438 = vmax.f32 %v394, 1e-24
        %v439 = vmax.f32 %v397, 1e-24
        %v440 = vmax.f32 %v400, 1e-24
        %v441 = vmax.f32 %v403, 1e-24
        %v442 = vmax.f32 %v406, 1e-24
        %v443 = vmax.f32 %v409, 1e-24
        %v444 = vmax.f32 %v412, 1e-24
        %v445 = vrsqrt.pop %v413
        %v446 = vrsqrt.pop %v414
        %v447 = vrsqrt.pop %v415
        %v448 = vrsqrt.pop %v416
        %v449 = vrsqrt.pop %v417
        %v450 = vrsqrt.pop %v418
        %v451 = vrsqrt.pop %v419
        %v452 = vrsqrt.pop %v420
        %v453 = vrsqrt.pop %v421
        %v454 = vrsqrt.pop %v422
        %v455 = vrsqrt.pop %v423
        %v456 = vrsqrt.pop %v424
        %v457 = vrsqrt.pop %v425
        %v458 = vrsqrt.pop %v426
        %v459 = vrsqrt.pop %v427
        %v460 = vrsqrt.pop %v428
        %v461 = vrsqrt.pop %v429
        %v462 = vrsqrt.pop %v430
        %v463 = vrsqrt.pop %v431
        %v464 = vrsqrt.pop %v432
        %v465 = vrsqrt.pop %v433
        %v466 = vrsqrt.pop %v434
        %v467 = vrsqrt.pop %v435
        %v468 = vrsqrt.pop %v436
        %v469 = vrsqrt.pop %v437
        %v470 = vrsqrt.pop %v438
        %v471 = vrsqrt.pop %v439
        %v472 = vrsqrt.pop %v440
        %v473 = vrsqrt.pop %v441
        %v474 = vrsqrt.pop %v442
        %v475 = vrsqrt.pop %v443
        %v476 = vrsqrt.pop %v444
        %v477 = vmul.f32 %v252, %v445
        %v478 = vmul.f32 %v253, %v446
        %v479 = vmul.f32 %v254, %v447
        %v480 = vmul.f32 %v255, %v448
        %v481 = vmul.f32 %v256, %v449
        %v482 = vmul.f32 %v257, %v450
        %v483 = vmul.f32 %v258, %v451
        %v484 = vmul.f32 %v259, %v452
        %v485 = vmul.f32 %v260, %v453
        %v486 = vmul.f32 %v261, %v454
        %v487 = vmul.f32 %v262, %v455
        %v488 = vmul.f32 %v263, %v456
        %v489 = vmul.f32 %v264, %v457
        %v490 = vmul.f32 %v265, %v458
        %v491 = vmul.f32 %v266, %v459
        %v492 = vmul.f32 %v267, %v460
        %v493 = vmul.f32 %v268, %v461
        %v494 = vmul.f32 %v269, %v462
        %v495 = vmul.f32 %v270, %v463
        %v496 = vmul.f32 %v271, %v464
        %v497 = vmul.f32 %v272, %v465
        %v498 = vmul.f32 %v273, %v466
        %v499 = vmul.f32 %v274, %v467
        %v500 = vmul.f32 %v275, %v468
        %v501 = vmul.f32 %v276, %v469
        %v502 = vmul.f32 %v277, %v470
        %v503 = vmul.f32 %v278, %v471
        %v504 = vmul.f32 %v279, %v472
        %v505 = vmul.f32 %v280, %v473
        %v506 = vmul.f32 %v281, %v474
        %v507 = vmul.f32 %v282, %v475
        %v508 = vmul.f32 %v283, %v476
        %v509 = vpack.c.bf16 %v478, %v477
        %v510 = vpack.c.bf16 %v480, %v479
        %v511 = vpack.c.bf16 %v482, %v481
        %v512 = vpack.c.bf16 %v484, %v483
        %v513 = vpack.c.bf16 %v486, %v485
        %v514 = vpack.c.bf16 %v488, %v487
        %v515 = vpack.c.bf16 %v490, %v489
        %v516 = vpack.c.bf16 %v492, %v491
        %v517 = vpack.c.bf16 %v494, %v493
        %v518 = vpack.c.bf16 %v496, %v495
        %v519 = vpack.c.bf16 %v498, %v497
        %v520 = vpack.c.bf16 %v500, %v499
        %v521 = vpack.c.bf16 %v502, %v501
        %v522 = vpack.c.bf16 %v504, %v503
        %v523 = vpack.c.bf16 %v506, %v505
        %v524 = vpack.c.bf16 %v508, %v507
        %v525 = vld [vmem:[%s1] sm:$0x3f]
        %v527 = vcombine.high %v525, %v525
        %v529 = vunpack.c.l.s4 1983009808
        %v530 = vunpack.c.0.s8 %v529
        %v531 = vlaneseq
        %v532 = vshrl.u32 %v531, 7
        %v533 = vsub.s32 %v530, %v532
        %v534 = vrot.slane %v525, %v533
        %v536 = vunpack.c.l.s4 1983009808
        %v537 = vunpack.c.0.s8 %v536
        %v538 = vlaneseq
        %v539 = vshrl.u32 %v538, 7
        %v540 = vsub.s32 %v537, %v539
        %v541 = vrot.slane %v527, %v540
        %v542 = vcombine.high %v534, %v534
        %v544 = vsel %vm316, %v509, 0
        %v547 = vsel %vm316, %v510, 0
        %v550 = vsel %vm316, %v511, 0
        %v553 = vsel %vm316, %v512, 0
        %v556 = vsel %vm316, %v513, 0
        %v559 = vsel %vm316, %v514, 0
        %v562 = vsel %vm316, %v515, 0
        %v565 = vsel %vm316, %v516, 0
        %v568 = vsel %vm316, %v517, 0
        %v571 = vsel %vm316, %v518, 0
        %v574 = vsel %vm316, %v519, 0
        %v577 = vsel %vm316, %v520, 0
        %v580 = vsel %vm316, %v521, 0
        %v583 = vsel %vm316, %v522, 0
        %v586 = vsel %vm316, %v523, 0
        %v589 = vsel %vm316, %v524, 0
        %vm591 = vcmask 1041408
        %v593 = vsel %vm591, %v534, 0
        %v596 = vsel %vm591, %v542, 0
        %v599 = vsel %vm591, %v541, 0
        %601 = vmatprep.subr.bf16.mxu0 0
        %602 = vmatpush1.bf16.msra.mxu0 0
        %603 = vmatprep.subr.bf16.mxu0 0
        %604 = vmatpush1.bf16.msra.mxu0 0
        %605 = vmatprep.subr.bf16.mxu0 0
        %606 = vmatpush1.bf16.msra.mxu0 0
        %607 = vmatprep.subr.bf16.mxu0 0
        %608 = vmatpush1.bf16.msra.mxu0 0
        %609 = vmatprep.subr.bf16.mxu0 0
        %610 = vmatpush1.bf16.msra.mxu0 0
        %611 = vmatprep.subr.bf16.mxu0 0
        %612 = vmatpush1.bf16.msra.mxu0 0
        %613 = vmatprep.subr.bf16.mxu0 0
        %614 = vmatpush1.bf16.msra.mxu0 0
        %615 = vmatprep.subr.bf16.mxu0 %v596
        %616 = vmatpush1.bf16.msra.mxu0 %v593
        %617 = vmatprep.subr.bf16.mxu0 0
        %618 = vmatpush2.bf16.msra.mxu0 0
        %619 = vmatprep.subr.bf16.mxu0 0
        %620 = vmatpush2.bf16.msra.mxu0 0
        %621 = vmatprep.subr.bf16.mxu0 0
        %622 = vmatpush2.bf16.msra.mxu0 0
        %623 = vmatprep.subr.bf16.mxu0 0
        %624 = vmatpush2.bf16.msra.mxu0 0
        %625 = vmatprep.subr.bf16.mxu0 0
        %626 = vmatpush2.bf16.msra.mxu0 0
        %627 = vmatprep.subr.bf16.mxu0 0
        %628 = vmatpush2.bf16.msra.mxu0 0
        %629 = vmatprep.subr.bf16.mxu0 0
        %630 = vmatpush2.bf16.msra.mxu0 0
        %631 = vmatprep.subr.bf16.mxu0 0
        %632 = vmatpush2.bf16.msra.mxu0 0
        %633 = vmatprep.mubr.bf16.mxu0 0
        %634 = vmatmul.mubr.bf16.gmra.mxu0 %v544
        %v635 = vpop.f32.mrf.mxu0
        %v636 = vadd.f32 0.0, %v635
        %v637 = vpop.f32.mrf.mxu0
        %v638 = vadd.f32 0.0, %v637
        %v639 = vpop.f32.mrf.mxu0
        %v640 = vadd.f32 0.0, %v639
        %v641 = vpop.f32.mrf.mxu0
        %v642 = vadd.f32 0.0, %v641
        %643 = vmatprep.mubr.bf16.mxu0 0
        %644 = vmatmul.mubr.bf16.gmra.mxu0 %v547
        %v645 = vpop.f32.mrf.mxu0
        %v646 = vadd.f32 0.0, %v645
        %v647 = vpop.f32.mrf.mxu0
        %v648 = vadd.f32 0.0, %v647
        %v649 = vpop.f32.mrf.mxu0
        %v650 = vadd.f32 0.0, %v649
        %v651 = vpop.f32.mrf.mxu0
        %v652 = vadd.f32 0.0, %v651
        %653 = vmatprep.mubr.bf16.mxu0 0
        %654 = vmatmul.mubr.bf16.gmra.mxu0 %v550
        %v655 = vpop.f32.mrf.mxu0
        %v656 = vadd.f32 0.0, %v655
        %v657 = vpop.f32.mrf.mxu0
        %v658 = vadd.f32 0.0, %v657
        %v659 = vpop.f32.mrf.mxu0
        %v660 = vadd.f32 0.0, %v659
        %v661 = vpop.f32.mrf.mxu0
        %v662 = vadd.f32 0.0, %v661
        %663 = vmatprep.mubr.bf16.mxu0 0
        %664 = vmatmul.mubr.bf16.gmra.mxu0 %v553
        %v665 = vpop.f32.mrf.mxu0
        %v666 = vadd.f32 0.0, %v665
        %v667 = vpop.f32.mrf.mxu0
        %v668 = vadd.f32 0.0, %v667
        %v669 = vpop.f32.mrf.mxu0
        %v670 = vadd.f32 0.0, %v669
        %v671 = vpop.f32.mrf.mxu0
        %v672 = vadd.f32 0.0, %v671
        %673 = vmatprep.mubr.bf16.mxu0 0
        %674 = vmatmul.mubr.bf16.gmra.mxu0 %v556
        %v675 = vpop.f32.mrf.mxu0
        %v676 = vadd.f32 0.0, %v675
        %v677 = vpop.f32.mrf.mxu0
        %v678 = vadd.f32 0.0, %v677
        %v679 = vpop.f32.mrf.mxu0
        %v680 = vadd.f32 0.0, %v679
        %v681 = vpop.f32.mrf.mxu0
        %v682 = vadd.f32 0.0, %v681
        %683 = vmatprep.mubr.bf16.mxu0 0
        %684 = vmatmul.mubr.bf16.gmra.mxu0 %v559
        %v685 = vpop.f32.mrf.mxu0
        %v686 = vadd.f32 0.0, %v685
        %v687 = vpop.f32.mrf.mxu0
        %v688 = vadd.f32 0.0, %v687
        %v689 = vpop.f32.mrf.mxu0
        %v690 = vadd.f32 0.0, %v689
        %v691 = vpop.f32.mrf.mxu0
        %v692 = vadd.f32 0.0, %v691
        %693 = vmatprep.mubr.bf16.mxu0 0
        %694 = vmatmul.mubr.bf16.gmra.mxu0 %v562
        %v695 = vpop.f32.mrf.mxu0
        %v696 = vadd.f32 0.0, %v695
        %v697 = vpop.f32.mrf.mxu0
        %v698 = vadd.f32 0.0, %v697
        %v699 = vpop.f32.mrf.mxu0
        %v700 = vadd.f32 0.0, %v699
        %v701 = vpop.f32.mrf.mxu0
        %v702 = vadd.f32 0.0, %v701
        %703 = vmatprep.mubr.bf16.mxu0 0
        %704 = vmatmul.mubr.bf16.gmra.mxu0 %v565
        %v705 = vpop.f32.mrf.mxu0
        %v706 = vadd.f32 0.0, %v705
        %v707 = vpop.f32.mrf.mxu0
        %v708 = vadd.f32 0.0, %v707
        %v709 = vpop.f32.mrf.mxu0
        %v710 = vadd.f32 0.0, %v709
        %v711 = vpop.f32.mrf.mxu0
        %v712 = vadd.f32 0.0, %v711
        %713 = vmatprep.mubr.bf16.mxu0 0
        %714 = vmatmul.mubr.bf16.gmra.mxu0 %v568
        %v715 = vpop.f32.mrf.mxu0
        %v716 = vadd.f32 0.0, %v715
        %v717 = vpop.f32.mrf.mxu0
        %v718 = vadd.f32 0.0, %v717
        %v719 = vpop.f32.mrf.mxu0
        %v720 = vadd.f32 0.0, %v719
        %v721 = vpop.f32.mrf.mxu0
        %v722 = vadd.f32 0.0, %v721
        %723 = vmatprep.mubr.bf16.mxu0 0
        %724 = vmatmul.mubr.bf16.gmra.mxu0 %v571
        %v725 = vpop.f32.mrf.mxu0
        %v726 = vadd.f32 0.0, %v725
        %v727 = vpop.f32.mrf.mxu0
        %v728 = vadd.f32 0.0, %v727
        %v729 = vpop.f32.mrf.mxu0
        %v730 = vadd.f32 0.0, %v729
        %v731 = vpop.f32.mrf.mxu0
        %v732 = vadd.f32 0.0, %v731
        %733 = vmatprep.mubr.bf16.mxu0 0
        %734 = vmatmul.mubr.bf16.gmra.mxu0 %v574
        %v735 = vpop.f32.mrf.mxu0
        %v736 = vadd.f32 0.0, %v735
        %v737 = vpop.f32.mrf.mxu0
        %v738 = vadd.f32 0.0, %v737
        %v739 = vpop.f32.mrf.mxu0
        %v740 = vadd.f32 0.0, %v739
        %v741 = vpop.f32.mrf.mxu0
        %v742 = vadd.f32 0.0, %v741
        %743 = vmatprep.mubr.bf16.mxu0 0
        %744 = vmatmul.mubr.bf16.gmra.mxu0 %v577
        %v745 = vpop.f32.mrf.mxu0
        %v746 = vadd.f32 0.0, %v745
        %v747 = vpop.f32.mrf.mxu0
        %v748 = vadd.f32 0.0, %v747
        %v749 = vpop.f32.mrf.mxu0
        %v750 = vadd.f32 0.0, %v749
        %v751 = vpop.f32.mrf.mxu0
        %v752 = vadd.f32 0.0, %v751
        %753 = vmatprep.mubr.bf16.mxu0 0
        %754 = vmatmul.mubr.bf16.gmra.mxu0 %v580
        %v755 = vpop.f32.mrf.mxu0
        %v756 = vadd.f32 0.0, %v755
        %v757 = vpop.f32.mrf.mxu0
        %v758 = vadd.f32 0.0, %v757
        %v759 = vpop.f32.mrf.mxu0
        %v760 = vadd.f32 0.0, %v759
        %v761 = vpop.f32.mrf.mxu0
        %v762 = vadd.f32 0.0, %v761
        %763 = vmatprep.mubr.bf16.mxu0 0
        %764 = vmatmul.mubr.bf16.gmra.mxu0 %v583
        %v765 = vpop.f32.mrf.mxu0
        %v766 = vadd.f32 0.0, %v765
        %v767 = vpop.f32.mrf.mxu0
        %v768 = vadd.f32 0.0, %v767
        %v769 = vpop.f32.mrf.mxu0
        %v770 = vadd.f32 0.0, %v769
        %v771 = vpop.f32.mrf.mxu0
        %v772 = vadd.f32 0.0, %v771
        %773 = vmatprep.mubr.bf16.mxu0 0
        %774 = vmatmul.mubr.bf16.gmra.mxu0 %v586
        %v775 = vpop.f32.mrf.mxu0
        %v776 = vadd.f32 0.0, %v775
        %v777 = vpop.f32.mrf.mxu0
        %v778 = vadd.f32 0.0, %v777
        %v779 = vpop.f32.mrf.mxu0
        %v780 = vadd.f32 0.0, %v779
        %v781 = vpop.f32.mrf.mxu0
        %v782 = vadd.f32 0.0, %v781
        %783 = vmatprep.mubr.bf16.mxu0 0
        %784 = vmatmul.mubr.bf16.gmra.mxu0 %v589
        %v785 = vpop.f32.mrf.mxu0
        %v786 = vadd.f32 0.0, %v785
        %v787 = vpop.f32.mrf.mxu0
        %v788 = vadd.f32 0.0, %v787
        %v789 = vpop.f32.mrf.mxu0
        %v790 = vadd.f32 0.0, %v789
        %v791 = vpop.f32.mrf.mxu0
        %v792 = vadd.f32 0.0, %v791
        %793 = vdwg.mxu0
        %794 = vmatprep.subr.bf16.mxu0 0
        %795 = vmatpush1.bf16.msra.mxu0 0
        %796 = vmatprep.subr.bf16.mxu0 0
        %797 = vmatpush1.bf16.msra.mxu0 0
        %798 = vmatprep.subr.bf16.mxu0 0
        %799 = vmatpush1.bf16.msra.mxu0 0
        %800 = vmatprep.subr.bf16.mxu0 0
        %801 = vmatpush1.bf16.msra.mxu0 0
        %802 = vmatprep.subr.bf16.mxu0 0
        %803 = vmatpush1.bf16.msra.mxu0 0
        %804 = vmatprep.subr.bf16.mxu0 0
        %805 = vmatpush1.bf16.msra.mxu0 0
        %806 = vmatprep.subr.bf16.mxu0 0
        %807 = vmatpush1.bf16.msra.mxu0 0
        %808 = vmatprep.subr.bf16.mxu0 0
        %809 = vmatpush1.bf16.msra.mxu0 %v599
        %810 = vmatprep.subr.bf16.mxu0 0
        %811 = vmatpush2.bf16.msra.mxu0 0
        %812 = vmatprep.subr.bf16.mxu0 0
        %813 = vmatpush2.bf16.msra.mxu0 0
        %814 = vmatprep.subr.bf16.mxu0 0
        %815 = vmatpush2.bf16.msra.mxu0 0
        %816 = vmatprep.subr.bf16.mxu0 0
        %817 = vmatpush2.bf16.msra.mxu0 0
        %818 = vmatprep.subr.bf16.mxu0 0
        %819 = vmatpush2.bf16.msra.mxu0 0
        %820 = vmatprep.subr.bf16.mxu0 0
        %821 = vmatpush2.bf16.msra.mxu0 0
        %822 = vmatprep.subr.bf16.mxu0 0
        %823 = vmatpush2.bf16.msra.mxu0 0
        %824 = vmatprep.subr.bf16.mxu0 0
        %825 = vmatpush2.bf16.msra.mxu0 0
        %826 = vmatprep.mubr.bf16.mxu0 0
        %827 = vmatmul.mubr.bf16.gmra.mxu0 %v544
        %v828 = vpop.f32.mrf.mxu0
        %v829 = vadd.f32 0.0, %v828
        %v830 = vpop.f32.mrf.mxu0
        %v831 = vpop.f32.mrf.mxu0
        %v832 = vadd.f32 0.0, %v831
        %v833 = vpop.f32.mrf.mxu0
        %834 = vmatprep.mubr.bf16.mxu0 0
        %835 = vmatmul.mubr.bf16.gmra.mxu0 %v547
        %v836 = vpop.f32.mrf.mxu0
        %v837 = vadd.f32 0.0, %v836
        %v838 = vpop.f32.mrf.mxu0
        %v839 = vpop.f32.mrf.mxu0
        %v840 = vadd.f32 0.0, %v839
        %v841 = vpop.f32.mrf.mxu0
        %842 = vmatprep.mubr.bf16.mxu0 0
        %843 = vmatmul.mubr.bf16.gmra.mxu0 %v550
        %v844 = vpop.f32.mrf.mxu0
        %v845 = vadd.f32 0.0, %v844
        %v846 = vpop.f32.mrf.mxu0
        %v847 = vpop.f32.mrf.mxu0
        %v848 = vadd.f32 0.0, %v847
        %v849 = vpop.f32.mrf.mxu0
        %850 = vmatprep.mubr.bf16.mxu0 0
        %851 = vmatmul.mubr.bf16.gmra.mxu0 %v553
        %v852 = vpop.f32.mrf.mxu0
        %v853 = vadd.f32 0.0, %v852
        %v854 = vpop.f32.mrf.mxu0
        %v855 = vpop.f32.mrf.mxu0
        %v856 = vadd.f32 0.0, %v855
        %v857 = vpop.f32.mrf.mxu0
        %858 = vmatprep.mubr.bf16.mxu0 0
        %859 = vmatmul.mubr.bf16.gmra.mxu0 %v556
        %v860 = vpop.f32.mrf.mxu0
        %v861 = vadd.f32 0.0, %v860
        %v862 = vpop.f32.mrf.mxu0
        %v863 = vpop.f32.mrf.mxu0
        %v864 = vadd.f32 0.0, %v863
        %v865 = vpop.f32.mrf.mxu0
        %866 = vmatprep.mubr.bf16.mxu0 0
        %867 = vmatmul.mubr.bf16.gmra.mxu0 %v559
        %v868 = vpop.f32.mrf.mxu0
        %v869 = vadd.f32 0.0, %v868
        %v870 = vpop.f32.mrf.mxu0
        %v871 = vpop.f32.mrf.mxu0
        %v872 = vadd.f32 0.0, %v871
        %v873 = vpop.f32.mrf.mxu0
        %874 = vmatprep.mubr.bf16.mxu0 0
        %875 = vmatmul.mubr.bf16.gmra.mxu0 %v562
        %v876 = vpop.f32.mrf.mxu0
        %v877 = vadd.f32 0.0, %v876
        %v878 = vpop.f32.mrf.mxu0
        %v879 = vpop.f32.mrf.mxu0
        %v880 = vadd.f32 0.0, %v879
        %v881 = vpop.f32.mrf.mxu0
        %882 = vmatprep.mubr.bf16.mxu0 0
        %883 = vmatmul.mubr.bf16.gmra.mxu0 %v565
        %v884 = vpop.f32.mrf.mxu0
        %v885 = vadd.f32 0.0, %v884
        %v886 = vpop.f32.mrf.mxu0
        %v887 = vpop.f32.mrf.mxu0
        %v888 = vadd.f32 0.0, %v887
        %v889 = vpop.f32.mrf.mxu0
        %890 = vmatprep.mubr.bf16.mxu0 0
        %891 = vmatmul.mubr.bf16.gmra.mxu0 %v568
        %v892 = vpop.f32.mrf.mxu0
        %v893 = vadd.f32 0.0, %v892
        %v894 = vpop.f32.mrf.mxu0
        %v895 = vpop.f32.mrf.mxu0
        %v896 = vadd.f32 0.0, %v895
        %v897 = vpop.f32.mrf.mxu0
        %898 = vmatprep.mubr.bf16.mxu0 0
        %899 = vmatmul.mubr.bf16.gmra.mxu0 %v571
        %v900 = vpop.f32.mrf.mxu0
        %v901 = vadd.f32 0.0, %v900
        %v902 = vpop.f32.mrf.mxu0
        %v903 = vpop.f32.mrf.mxu0
        %v904 = vadd.f32 0.0, %v903
        %v905 = vpop.f32.mrf.mxu0
        %906 = vmatprep.mubr.bf16.mxu0 0
        %907 = vmatmul.mubr.bf16.gmra.mxu0 %v574
        %v908 = vpop.f32.mrf.mxu0
        %v909 = vadd.f32 0.0, %v908
        %v910 = vpop.f32.mrf.mxu0
        %v911 = vpop.f32.mrf.mxu0
        %v912 = vadd.f32 0.0, %v911
        %v913 = vpop.f32.mrf.mxu0
        %914 = vmatprep.mubr.bf16.mxu0 0
        %915 = vmatmul.mubr.bf16.gmra.mxu0 %v577
        %v916 = vpop.f32.mrf.mxu0
        %v917 = vadd.f32 0.0, %v916
        %v918 = vpop.f32.mrf.mxu0
        %v919 = vpop.f32.mrf.mxu0
        %v920 = vadd.f32 0.0, %v919
        %v921 = vpop.f32.mrf.mxu0
        %922 = vmatprep.mubr.bf16.mxu0 0
        %923 = vmatmul.mubr.bf16.gmra.mxu0 %v580
        %v924 = vpop.f32.mrf.mxu0
        %v925 = vadd.f32 0.0, %v924
        %v926 = vpop.f32.mrf.mxu0
        %v927 = vpop.f32.mrf.mxu0
        %v928 = vadd.f32 0.0, %v927
        %v929 = vpop.f32.mrf.mxu0
        %930 = vmatprep.mubr.bf16.mxu0 0
        %931 = vmatmul.mubr.bf16.gmra.mxu0 %v583
        %v932 = vpop.f32.mrf.mxu0
        %v933 = vadd.f32 0.0, %v932
        %v934 = vpop.f32.mrf.mxu0
        %v935 = vpop.f32.mrf.mxu0
        %v936 = vadd.f32 0.0, %v935
        %v937 = vpop.f32.mrf.mxu0
        %938 = vmatprep.mubr.bf16.mxu0 0
        %939 = vmatmul.mubr.bf16.gmra.mxu0 %v586
        %v940 = vpop.f32.mrf.mxu0
        %v941 = vadd.f32 0.0, %v940
        %v942 = vpop.f32.mrf.mxu0
        %v943 = vpop.f32.mrf.mxu0
        %v944 = vadd.f32 0.0, %v943
        %v945 = vpop.f32.mrf.mxu0
        %946 = vmatprep.mubr.bf16.mxu0 0
        %947 = vmatmul.mubr.bf16.gmra.mxu0 %v589
        %v948 = vpop.f32.mrf.mxu0
        %v949 = vadd.f32 0.0, %v948
        %v950 = vpop.f32.mrf.mxu0
        %v951 = vpop.f32.mrf.mxu0
        %v952 = vadd.f32 0.0, %v951
        %v953 = vpop.f32.mrf.mxu0
        %954 = vdwg.mxu0
        %v955 = vpack.c.bf16 %v640, %v636
        %v956 = vpack.c.bf16 %v650, %v646
        %v957 = vpack.c.bf16 %v660, %v656
        %v958 = vpack.c.bf16 %v670, %v666
        %v959 = vpack.c.bf16 %v680, %v676
        %v960 = vpack.c.bf16 %v690, %v686
        %v961 = vpack.c.bf16 %v700, %v696
        %v962 = vpack.c.bf16 %v710, %v706
        %v963 = vpack.c.bf16 %v720, %v716
        %v964 = vpack.c.bf16 %v730, %v726
        %v965 = vpack.c.bf16 %v740, %v736
        %v966 = vpack.c.bf16 %v750, %v746
        %v967 = vpack.c.bf16 %v760, %v756
        %v968 = vpack.c.bf16 %v770, %v766
        %v969 = vpack.c.bf16 %v780, %v776
        %v970 = vpack.c.bf16 %v790, %v786
        %v987 = vunpack.c.l.b16 %v955
        %v988 = vunpack.c.h.b16 %v955
        %v989 = vunpack.c.l.b16 %v956
        %v990 = vunpack.c.h.b16 %v956
        %v991 = vunpack.c.l.b16 %v957
        %v992 = vunpack.c.h.b16 %v957
        %v993 = vunpack.c.l.b16 %v958
        %v994 = vunpack.c.h.b16 %v958
        %v995 = vunpack.c.l.b16 %v959
        %v996 = vunpack.c.h.b16 %v959
        %v997 = vunpack.c.l.b16 %v960
        %v998 = vunpack.c.h.b16 %v960
        %v999 = vunpack.c.l.b16 %v961
        %v1000 = vunpack.c.h.b16 %v961
        %v1001 = vunpack.c.l.b16 %v962
        %v1002 = vunpack.c.h.b16 %v962
        %v1003 = vunpack.c.l.b16 %v963
        %v1004 = vunpack.c.h.b16 %v963
        %v1005 = vunpack.c.l.b16 %v964
        %v1006 = vunpack.c.h.b16 %v964
        %v1007 = vunpack.c.l.b16 %v965
        %v1008 = vunpack.c.h.b16 %v965
        %v1009 = vunpack.c.l.b16 %v966
        %v1010 = vunpack.c.h.b16 %v966
        %v1011 = vunpack.c.l.b16 %v967
        %v1012 = vunpack.c.h.b16 %v967
        %v1013 = vunpack.c.l.b16 %v968
        %v1014 = vunpack.c.h.b16 %v968
        %v1015 = vunpack.c.l.b16 %v969
        %v1016 = vunpack.c.h.b16 %v969
        %v1017 = vunpack.c.l.b16 %v970
        %v1018 = vunpack.c.h.b16 %v970
        %v1019 = vpack.c.b16 %v987, %v987
        %v1020 = vpack.c.b16 %v988, %v988
        %v1021 = vpack.c.b16 %v989, %v989
        %v1022 = vpack.c.b16 %v990, %v990
        %v1023 = vpack.c.b16 %v991, %v991
        %v1024 = vpack.c.b16 %v992, %v992
        %v1025 = vpack.c.b16 %v993, %v993
        %v1026 = vpack.c.b16 %v994, %v994
        %v1027 = vpack.c.b16 %v995, %v995
        %v1028 = vpack.c.b16 %v996, %v996
        %v1029 = vpack.c.b16 %v997, %v997
        %v1030 = vpack.c.b16 %v998, %v998
        %v1031 = vpack.c.b16 %v999, %v999
        %v1032 = vpack.c.b16 %v1000, %v1000
        %v1033 = vpack.c.b16 %v1001, %v1001
        %v1034 = vpack.c.b16 %v1002, %v1002
        %v1035 = vpack.c.b16 %v1003, %v1003
        %v1036 = vpack.c.b16 %v1004, %v1004
        %v1037 = vpack.c.b16 %v1005, %v1005
        %v1038 = vpack.c.b16 %v1006, %v1006
        %v1039 = vpack.c.b16 %v1007, %v1007
        %v1040 = vpack.c.b16 %v1008, %v1008
        %v1041 = vpack.c.b16 %v1009, %v1009
        %v1042 = vpack.c.b16 %v1010, %v1010
        %v1043 = vpack.c.b16 %v1011, %v1011
        %v1044 = vpack.c.b16 %v1012, %v1012
        %v1045 = vpack.c.b16 %v1013, %v1013
        %v1046 = vpack.c.b16 %v1014, %v1014
        %v1047 = vpack.c.b16 %v1015, %v1015
        %v1048 = vpack.c.b16 %v1016, %v1016
        %v1049 = vpack.c.b16 %v1017, %v1017
        %v1050 = vpack.c.b16 %v1018, %v1018
        %1083 = vst [vmem:[%s223] sm:$0xf] %v1019
        %1084 = vst [vmem:[%s223 + $0x4] sm:$0xf] %v1020
        %1085 = vst [vmem:[%s223 + $0x8] sm:$0xf] %v1021
        %1086 = vst [vmem:[%s223 + $0xc] sm:$0xf] %v1022
        %1087 = vst [vmem:[%s223 + $0x10] sm:$0xf] %v1023
        %1088 = vst [vmem:[%s223 + $0x14] sm:$0xf] %v1024
        %1089 = vst [vmem:[%s223 + $0x18] sm:$0xf] %v1025
        %1090 = vst [vmem:[%s223 + $0x1c] sm:$0xf] %v1026
        %1091 = vst [vmem:[%s223 + $0x20] sm:$0xf] %v1027
        %1092 = vst [vmem:[%s223 + $0x24] sm:$0xf] %v1028
        %1093 = vst [vmem:[%s223 + $0x28] sm:$0xf] %v1029
        %1094 = vst [vmem:[%s223 + $0x2c] sm:$0xf] %v1030
        %1095 = vst [vmem:[%s223 + $0x30] sm:$0xf] %v1031
        %1096 = vst [vmem:[%s223 + $0x34] sm:$0xf] %v1032
        %1097 = vst [vmem:[%s223 + $0x38] sm:$0xf] %v1033
        %1098 = vst [vmem:[%s223 + $0x3c] sm:$0xf] %v1034
        %1099 = vst [vmem:[%s223 + $0x40] sm:$0xf] %v1035
        %1100 = vst [vmem:[%s223 + $0x44] sm:$0xf] %v1036
        %1101 = vst [vmem:[%s223 + $0x48] sm:$0xf] %v1037
        %1102 = vst [vmem:[%s223 + $0x4c] sm:$0xf] %v1038
        %1103 = vst [vmem:[%s223 + $0x50] sm:$0xf] %v1039
        %1104 = vst [vmem:[%s223 + $0x54] sm:$0xf] %v1040
        %1105 = vst [vmem:[%s223 + $0x58] sm:$0xf] %v1041
        %1106 = vst [vmem:[%s223 + $0x5c] sm:$0xf] %v1042
        %1107 = vst [vmem:[%s223 + $0x60] sm:$0xf] %v1043
        %1108 = vst [vmem:[%s223 + $0x64] sm:$0xf] %v1044
        %1109 = vst [vmem:[%s223 + $0x68] sm:$0xf] %v1045
        %1110 = vst [vmem:[%s223 + $0x6c] sm:$0xf] %v1046
        %1111 = vst [vmem:[%s223 + $0x70] sm:$0xf] %v1047
        %1112 = vst [vmem:[%s223 + $0x74] sm:$0xf] %v1048
        %1113 = vst [vmem:[%s223 + $0x78] sm:$0xf] %v1049
        %1114 = vst [vmem:[%s223 + $0x7c] sm:$0xf] %v1050
        %v1115 = vpack.c.bf16 %v642, %v638
        %v1116 = vpack.c.bf16 %v652, %v648
        %v1117 = vpack.c.bf16 %v662, %v658
        %v1118 = vpack.c.bf16 %v672, %v668
        %v1119 = vpack.c.bf16 %v682, %v678
        %v1120 = vpack.c.bf16 %v692, %v688
        %v1121 = vpack.c.bf16 %v702, %v698
        %v1122 = vpack.c.bf16 %v712, %v708
        %v1123 = vpack.c.bf16 %v722, %v718
        %v1124 = vpack.c.bf16 %v732, %v728
        %v1125 = vpack.c.bf16 %v742, %v738
        %v1126 = vpack.c.bf16 %v752, %v748
        %v1127 = vpack.c.bf16 %v762, %v758
        %v1128 = vpack.c.bf16 %v772, %v768
        %v1129 = vpack.c.bf16 %v782, %v778
        %v1130 = vpack.c.bf16 %v792, %v788
        %v1147 = vunpack.c.l.b16 %v1115
        %v1148 = vunpack.c.h.b16 %v1115
        %v1149 = vunpack.c.l.b16 %v1116
        %v1150 = vunpack.c.h.b16 %v1116
        %v1151 = vunpack.c.l.b16 %v1117
        %v1152 = vunpack.c.h.b16 %v1117
        %v1153 = vunpack.c.l.b16 %v1118
        %v1154 = vunpack.c.h.b16 %v1118
        %v1155 = vunpack.c.l.b16 %v1119
        %v1156 = vunpack.c.h.b16 %v1119
        %v1157 = vunpack.c.l.b16 %v1120
        %v1158 = vunpack.c.h.b16 %v1120
        %v1159 = vunpack.c.l.b16 %v1121
        %v1160 = vunpack.c.h.b16 %v1121
        %v1161 = vunpack.c.l.b16 %v1122
        %v1162 = vunpack.c.h.b16 %v1122
        %v1163 = vunpack.c.l.b16 %v1123
        %v1164 = vunpack.c.h.b16 %v1123
        %v1165 = vunpack.c.l.b16 %v1124
        %v1166 = vunpack.c.h.b16 %v1124
        %v1167 = vunpack.c.l.b16 %v1125
        %v1168 = vunpack.c.h.b16 %v1125
        %v1169 = vunpack.c.l.b16 %v1126
        %v1170 = vunpack.c.h.b16 %v1126
        %v1171 = vunpack.c.l.b16 %v1127
        %v1172 = vunpack.c.h.b16 %v1127
        %v1173 = vunpack.c.l.b16 %v1128
        %v1174 = vunpack.c.h.b16 %v1128
        %v1175 = vunpack.c.l.b16 %v1129
        %v1176 = vunpack.c.h.b16 %v1129
        %v1177 = vunpack.c.l.b16 %v1130
        %v1178 = vunpack.c.h.b16 %v1130
        %v1179 = vpack.c.b16 %v1147, %v1147
        %v1180 = vpack.c.b16 %v1148, %v1148
        %v1181 = vpack.c.b16 %v1149, %v1149
        %v1182 = vpack.c.b16 %v1150, %v1150
        %v1183 = vpack.c.b16 %v1151, %v1151
        %v1184 = vpack.c.b16 %v1152, %v1152
        %v1185 = vpack.c.b16 %v1153, %v1153
        %v1186 = vpack.c.b16 %v1154, %v1154
        %v1187 = vpack.c.b16 %v1155, %v1155
        %v1188 = vpack.c.b16 %v1156, %v1156
        %v1189 = vpack.c.b16 %v1157, %v1157
        %v1190 = vpack.c.b16 %v1158, %v1158
        %v1191 = vpack.c.b16 %v1159, %v1159
        %v1192 = vpack.c.b16 %v1160, %v1160
        %v1193 = vpack.c.b16 %v1161, %v1161
        %v1194 = vpack.c.b16 %v1162, %v1162
        %v1195 = vpack.c.b16 %v1163, %v1163
        %v1196 = vpack.c.b16 %v1164, %v1164
        %v1197 = vpack.c.b16 %v1165, %v1165
        %v1198 = vpack.c.b16 %v1166, %v1166
        %v1199 = vpack.c.b16 %v1167, %v1167
        %v1200 = vpack.c.b16 %v1168, %v1168
        %v1201 = vpack.c.b16 %v1169, %v1169
        %v1202 = vpack.c.b16 %v1170, %v1170
        %v1203 = vpack.c.b16 %v1171, %v1171
        %v1204 = vpack.c.b16 %v1172, %v1172
        %v1205 = vpack.c.b16 %v1173, %v1173
        %v1206 = vpack.c.b16 %v1174, %v1174
        %v1207 = vpack.c.b16 %v1175, %v1175
        %v1208 = vpack.c.b16 %v1176, %v1176
        %v1209 = vpack.c.b16 %v1177, %v1177
        %v1210 = vpack.c.b16 %v1178, %v1178
        %1243 = vst [vmem:[%s230] sm:$0xf] %v1179
        %1244 = vst [vmem:[%s230 + $0x4] sm:$0xf] %v1180
        %1245 = vst [vmem:[%s230 + $0x8] sm:$0xf] %v1181
        %1246 = vst [vmem:[%s230 + $0xc] sm:$0xf] %v1182
        %1247 = vst [vmem:[%s230 + $0x10] sm:$0xf] %v1183
        %1248 = vst [vmem:[%s230 + $0x14] sm:$0xf] %v1184
        %1249 = vst [vmem:[%s230 + $0x18] sm:$0xf] %v1185
        %1250 = vst [vmem:[%s230 + $0x1c] sm:$0xf] %v1186
        %1251 = vst [vmem:[%s230 + $0x20] sm:$0xf] %v1187
        %1252 = vst [vmem:[%s230 + $0x24] sm:$0xf] %v1188
        %1253 = vst [vmem:[%s230 + $0x28] sm:$0xf] %v1189
        %1254 = vst [vmem:[%s230 + $0x2c] sm:$0xf] %v1190
        %1255 = vst [vmem:[%s230 + $0x30] sm:$0xf] %v1191
        %1256 = vst [vmem:[%s230 + $0x34] sm:$0xf] %v1192
        %1257 = vst [vmem:[%s230 + $0x38] sm:$0xf] %v1193
        %1258 = vst [vmem:[%s230 + $0x3c] sm:$0xf] %v1194
        %1259 = vst [vmem:[%s230 + $0x40] sm:$0xf] %v1195
        %1260 = vst [vmem:[%s230 + $0x44] sm:$0xf] %v1196
        %1261 = vst [vmem:[%s230 + $0x48] sm:$0xf] %v1197
        %1262 = vst [vmem:[%s230 + $0x4c] sm:$0xf] %v1198
        %1263 = vst [vmem:[%s230 + $0x50] sm:$0xf] %v1199
        %1264 = vst [vmem:[%s230 + $0x54] sm:$0xf] %v1200
        %1265 = vst [vmem:[%s230 + $0x58] sm:$0xf] %v1201
        %1266 = vst [vmem:[%s230 + $0x5c] sm:$0xf] %v1202
        %1267 = vst [vmem:[%s230 + $0x60] sm:$0xf] %v1203
        %1268 = vst [vmem:[%s230 + $0x64] sm:$0xf] %v1204
        %1269 = vst [vmem:[%s230 + $0x68] sm:$0xf] %v1205
        %1270 = vst [vmem:[%s230 + $0x6c] sm:$0xf] %v1206
        %1271 = vst [vmem:[%s230 + $0x70] sm:$0xf] %v1207
        %1272 = vst [vmem:[%s230 + $0x74] sm:$0xf] %v1208
        %1273 = vst [vmem:[%s230 + $0x78] sm:$0xf] %v1209
        %1274 = vst [vmem:[%s230 + $0x7c] sm:$0xf] %v1210
        %v1275 = vpack.c.bf16 %v832, %v829
        %v1276 = vpack.c.bf16 %v840, %v837
        %v1277 = vpack.c.bf16 %v848, %v845
        %v1278 = vpack.c.bf16 %v856, %v853
        %v1279 = vpack.c.bf16 %v864, %v861
        %v1280 = vpack.c.bf16 %v872, %v869
        %v1281 = vpack.c.bf16 %v880, %v877
        %v1282 = vpack.c.bf16 %v888, %v885
        %v1283 = vpack.c.bf16 %v896, %v893
        %v1284 = vpack.c.bf16 %v904, %v901
        %v1285 = vpack.c.bf16 %v912, %v909
        %v1286 = vpack.c.bf16 %v920, %v917
        %v1287 = vpack.c.bf16 %v928, %v925
        %v1288 = vpack.c.bf16 %v936, %v933
        %v1289 = vpack.c.bf16 %v944, %v941
        %v1290 = vpack.c.bf16 %v952, %v949
        %v1307 = vunpack.c.l.b16 %v1275
        %v1308 = vunpack.c.h.b16 %v1275
        %v1309 = vunpack.c.l.b16 %v1276
        %v1310 = vunpack.c.h.b16 %v1276
        %v1311 = vunpack.c.l.b16 %v1277
        %v1312 = vunpack.c.h.b16 %v1277
        %v1313 = vunpack.c.l.b16 %v1278
        %v1314 = vunpack.c.h.b16 %v1278
        %v1315 = vunpack.c.l.b16 %v1279
        %v1316 = vunpack.c.h.b16 %v1279
        %v1317 = vunpack.c.l.b16 %v1280
        %v1318 = vunpack.c.h.b16 %v1280
        %v1319 = vunpack.c.l.b16 %v1281
        %v1320 = vunpack.c.h.b16 %v1281
        %v1321 = vunpack.c.l.b16 %v1282
        %v1322 = vunpack.c.h.b16 %v1282
        %v1323 = vunpack.c.l.b16 %v1283
        %v1324 = vunpack.c.h.b16 %v1283
        %v1325 = vunpack.c.l.b16 %v1284
        %v1326 = vunpack.c.h.b16 %v1284
        %v1327 = vunpack.c.l.b16 %v1285
        %v1328 = vunpack.c.h.b16 %v1285
        %v1329 = vunpack.c.l.b16 %v1286
        %v1330 = vunpack.c.h.b16 %v1286
        %v1331 = vunpack.c.l.b16 %v1287
        %v1332 = vunpack.c.h.b16 %v1287
        %v1333 = vunpack.c.l.b16 %v1288
        %v1334 = vunpack.c.h.b16 %v1288
        %v1335 = vunpack.c.l.b16 %v1289
        %v1336 = vunpack.c.h.b16 %v1289
        %v1337 = vunpack.c.l.b16 %v1290
        %v1338 = vunpack.c.h.b16 %v1290
        %v1339 = vpack.c.b16 %v1307, %v1307
        %v1340 = vpack.c.b16 %v1308, %v1308
        %v1341 = vpack.c.b16 %v1309, %v1309
        %v1342 = vpack.c.b16 %v1310, %v1310
        %v1343 = vpack.c.b16 %v1311, %v1311
        %v1344 = vpack.c.b16 %v1312, %v1312
        %v1345 = vpack.c.b16 %v1313, %v1313
        %v1346 = vpack.c.b16 %v1314, %v1314
        %v1347 = vpack.c.b16 %v1315, %v1315
        %v1348 = vpack.c.b16 %v1316, %v1316
        %v1349 = vpack.c.b16 %v1317, %v1317
        %v1350 = vpack.c.b16 %v1318, %v1318
        %v1351 = vpack.c.b16 %v1319, %v1319
        %v1352 = vpack.c.b16 %v1320, %v1320
        %v1353 = vpack.c.b16 %v1321, %v1321
        %v1354 = vpack.c.b16 %v1322, %v1322
        %v1355 = vpack.c.b16 %v1323, %v1323
        %v1356 = vpack.c.b16 %v1324, %v1324
        %v1357 = vpack.c.b16 %v1325, %v1325
        %v1358 = vpack.c.b16 %v1326, %v1326
        %v1359 = vpack.c.b16 %v1327, %v1327
        %v1360 = vpack.c.b16 %v1328, %v1328
        %v1361 = vpack.c.b16 %v1329, %v1329
        %v1362 = vpack.c.b16 %v1330, %v1330
        %v1363 = vpack.c.b16 %v1331, %v1331
        %v1364 = vpack.c.b16 %v1332, %v1332
        %v1365 = vpack.c.b16 %v1333, %v1333
        %v1366 = vpack.c.b16 %v1334, %v1334
        %v1367 = vpack.c.b16 %v1335, %v1335
        %v1368 = vpack.c.b16 %v1336, %v1336
        %v1369 = vpack.c.b16 %v1337, %v1337
        %v1370 = vpack.c.b16 %v1338, %v1338
        %1403 = vst [vmem:[%s237] sm:$0xf] %v1339
        %1404 = vst [vmem:[%s237 + $0x4] sm:$0xf] %v1340
        %1405 = vst [vmem:[%s237 + $0x8] sm:$0xf] %v1341
        %1406 = vst [vmem:[%s237 + $0xc] sm:$0xf] %v1342
        %1407 = vst [vmem:[%s237 + $0x10] sm:$0xf] %v1343
        %1408 = vst [vmem:[%s237 + $0x14] sm:$0xf] %v1344
        %1409 = vst [vmem:[%s237 + $0x18] sm:$0xf] %v1345
        %1410 = vst [vmem:[%s237 + $0x1c] sm:$0xf] %v1346
        %1411 = vst [vmem:[%s237 + $0x20] sm:$0xf] %v1347
        %1412 = vst [vmem:[%s237 + $0x24] sm:$0xf] %v1348
        %1413 = vst [vmem:[%s237 + $0x28] sm:$0xf] %v1349
        %1414 = vst [vmem:[%s237 + $0x2c] sm:$0xf] %v1350
        %1415 = vst [vmem:[%s237 + $0x30] sm:$0xf] %v1351
        %1416 = vst [vmem:[%s237 + $0x34] sm:$0xf] %v1352
        %1417 = vst [vmem:[%s237 + $0x38] sm:$0xf] %v1353
        %1418 = vst [vmem:[%s237 + $0x3c] sm:$0xf] %v1354
        %1419 = vst [vmem:[%s237 + $0x40] sm:$0xf] %v1355
        %1420 = vst [vmem:[%s237 + $0x44] sm:$0xf] %v1356
        %1421 = vst [vmem:[%s237 + $0x48] sm:$0xf] %v1357
        %1422 = vst [vmem:[%s237 + $0x4c] sm:$0xf] %v1358
        %1423 = vst [vmem:[%s237 + $0x50] sm:$0xf] %v1359
        %1424 = vst [vmem:[%s237 + $0x54] sm:$0xf] %v1360
        %1425 = vst [vmem:[%s237 + $0x58] sm:$0xf] %v1361
        %1426 = vst [vmem:[%s237 + $0x5c] sm:$0xf] %v1362
        %1427 = vst [vmem:[%s237 + $0x60] sm:$0xf] %v1363
        %1428 = vst [vmem:[%s237 + $0x64] sm:$0xf] %v1364
        %1429 = vst [vmem:[%s237 + $0x68] sm:$0xf] %v1365
        %1430 = vst [vmem:[%s237 + $0x6c] sm:$0xf] %v1366
        %1431 = vst [vmem:[%s237 + $0x70] sm:$0xf] %v1367
        %1432 = vst [vmem:[%s237 + $0x74] sm:$0xf] %v1368
        %1433 = vst [vmem:[%s237 + $0x78] sm:$0xf] %v1369
        %1434 = vst [vmem:[%s237 + $0x7c] sm:$0xf] %v1370
        %s1435 = sand.u32 %s93, 1
        %s1436 = scalar_lea.sflag [#allocation3], %s1435
        %s1437 = sand.u32 %s93, 1
        %s1438 = smul.addr %s1437, 128
        %s1439 = scalar_lea.vmem [#allocation2], %s1438
        %s1440 = sand.u32 %s22, 1
        %s1441 = scalar_lea.sflag [#allocation5], %s1440
        %s1442 = sand.u32 %s121, 1
        %s1443 = smul.addr %s1442, 128
        %s1444 = scalar_lea.vmem [#allocation4], %s1443
        %s1445 = sand.u32 %s22, 1
        %s1446 = scalar_lea.sflag [#allocation5], %s1445
        %s1447 = sand.u32 %s149, 1
        %s1448 = smul.addr %s1447, 128
        %s1449 = scalar_lea.vmem [#allocation6], %s1448
        // Predicated region
        $region29: #{tpu_custom_call.1} parent=27 // pred_check
          %p1450 = pneg %p103
        $region30: #{tpu_custom_call.1} parent=27 // pred_check_branch
          %1452 = sbr.rel (%p1450) target = $region32
        $region31: #{tpu_custom_call.1} parent=27 // pred_region
          %s1453 = smul.u32 32, %s27
          %s1455 = ssub.s32 2048, 2048
          %1456 = vsyncadd %s1436, %s1455
          %s1457 = smul.addr %s26, 32
          %s1458 = sadd.s32 %s1453, %s1457
          %s1459 = smul.addr %s1458, 64
          %s1460 = scalar_lea.hbm %s2, %s1459
          %s1461 = sshll.u32 %s1439, 4
          %s1462 = int_to_ptr.vmem [resolvable:$true] %s1461
          %1467 = dma.vmem_to_hbm [thread:$0]  %s1462, 2048, %s1460, %s1436, 64, 64, 4
        $region32: #{tpu_custom_call.1} parent=27 // pred_fallthru
          _
        // Predicated region
        $region33: #{tpu_custom_call.1} parent=27 // pred_check
          %p1468 = pneg %p131
        $region34: #{tpu_custom_call.1} parent=27 // pred_check_branch
          %1470 = sbr.rel (%p1468) target = $region36
        $region35: #{tpu_custom_call.1} parent=27 // pred_region
          %s1471 = smul.u32 32, %s27
          %s1473 = ssub.s32 2048, 2048
          %1474 = vsyncadd %s1441, %s1473
          %s1475 = smul.addr %s26, 32
          %s1476 = sadd.s32 %s1471, %s1475
          %s1477 = smul.addr %s1476, 64
          %s1478 = scalar_lea.hbm %s3, %s1477
          %s1479 = sshll.u32 %s1444, 4
          %s1480 = int_to_ptr.vmem [resolvable:$true] %s1479
          %1485 = dma.vmem_to_hbm [thread:$0]  %s1480, 2048, %s1478, %s1441, 64, 64, 4
        $region36: #{tpu_custom_call.1} parent=27 // pred_fallthru
          _
        // Predicated region
        $region37: #{tpu_custom_call.1} parent=27 // pred_check
          %p1486 = pneg %p159
        $region38: #{tpu_custom_call.1} parent=27 // pred_check_branch
          %1488 = sbr.rel (%p1486) target = $region40
        $region39: #{tpu_custom_call.1} parent=27 // pred_region
          %s1489 = smul.u32 32, %s27
          %s1491 = ssub.s32 2048, 2048
          %1492 = vsyncadd %s1446, %s1491
          %s1493 = smul.addr %s26, 32
          %s1494 = sadd.s32 %s1489, %s1493
          %s1495 = smul.addr %s1494, 64
          %s1496 = scalar_lea.hbm %s4, %s1495
          %s1497 = sshll.u32 %s1449, 4
          %s1498 = int_to_ptr.vmem [resolvable:$true] %s1497
          %1503 = dma.vmem_to_hbm [thread:$0]  %s1498, 2048, %s1496, %s1446, 64, 64, 4
        $region40: #{tpu_custom_call.1} parent=27 // pred_fallthru
          _
      $region28: #{tpu_custom_call.1} parent=5 // pred_fallthru
        _
      %p1504 = scmp.le.s32.totalorder 2, %s17
      // Predicated region
      $region41: #{tpu_custom_call.1} parent=5 // pred_check
        %p1505 = pneg %p1504
      $region42: #{tpu_custom_call.1} parent=5 // pred_check_branch
        %1507 = sbr.rel (%p1505) target = $region44
      $region43: #{tpu_custom_call.1} parent=5 // pred_region
        %s1508 = ssub.s32 %s17, 2
        // Predicated region
        $region45: #{tpu_custom_call.1} parent=43 // pred_check
          %p1509 = pneg %p109
        $region46: #{tpu_custom_call.1} parent=43 // pred_check_branch
          %1511 = sbr.rel (%p1509) target = $region48
        $region47: #{tpu_custom_call.1} parent=43 // pred_region
          %s1512 = sand.u32 %s94, 1
          %s1513 = scalar_lea.sflag [#allocation3], %s1512
          %s1514 = sand.u32 %s94, 1
          %s1515 = smul.addr %s1514, 128
          %s1516 = scalar_lea.vmem [#allocation2], %s1515
          %1517 = dma.done %s1513, 2048
        $region48: #{tpu_custom_call.1} parent=43 // pred_fallthru
          _
        // Predicated region
        $region49: #{tpu_custom_call.1} parent=43 // pred_check
          %p1518 = pneg %p137
        $region50: #{tpu_custom_call.1} parent=43 // pred_check_branch
          %1520 = sbr.rel (%p1518) target = $region52
        $region51: #{tpu_custom_call.1} parent=43 // pred_region
          %s1521 = sand.u32 %s23, 1
          %s1522 = scalar_lea.sflag [#allocation5], %s1521
          %s1523 = sand.u32 %s122, 1
          %s1524 = smul.addr %s1523, 128
          %s1525 = scalar_lea.vmem [#allocation4], %s1524
          %1526 = dma.done %s1522, 2048
        $region52: #{tpu_custom_call.1} parent=43 // pred_fallthru
          _
        // Predicated region
        $region53: #{tpu_custom_call.1} parent=43 // pred_check
          %p1527 = pneg %p165
        $region54: #{tpu_custom_call.1} parent=43 // pred_check_branch
          %1529 = sbr.rel (%p1527) target = $region56
        $region55: #{tpu_custom_call.1} parent=43 // pred_region
          %s1530 = sand.u32 %s23, 1
          %s1531 = scalar_lea.sflag [#allocation5], %s1530
          %s1532 = sand.u32 %s150, 1
          %s1533 = smul.addr %s1532, 128
          %s1534 = scalar_lea.vmem [#allocation6], %s1533
          %1535 = dma.done %s1531, 2048
        $region56: #{tpu_custom_call.1} parent=43 // pred_fallthru
          _
      $region44: #{tpu_custom_call.1} parent=5 // pred_fallthru
        _
    $region6: #{tpu_custom_call.1} parent=1 // loop_footer
      %s21 = sadd.s32 1, %s17
    $region7: #{tpu_custom_call.1} parent=1 // loop_footer_branch
      %16 = sbr.rel target = $region3
    $region8: #{tpu_custom_call.1} parent=1 // loop_exit
      _
    %1536 = vsyncpa [#allocation3], 1
    %s1537 = scalar_lea.sflag [#allocation3], 1
    %1538 = vsyncpa %s1537, 1
    %1539 = vsyncpa [#allocation5], 1
    %s1540 = scalar_lea.sflag [#allocation5], 1
    %1541 = vsyncpa %s1540, 1

</llo_original>
